<compile_context>
chip_gen: v7x
topology: tpu7x:2x2x1
jax: 0.10.0
libtpu: 0.0.40
codegen_flags: <defaults>
</compile_context>

<pallas_src>
import jax
import jax.numpy as jnp
import numpy as np
from jax.experimental import pallas as pl
from jax.experimental.pallas import tpu as pltpu


def _bio_pos_enc_kernel(pos_ref,    # (TB, 1)        int32  positions for this tile
                        fused_ref,  # (max_len, D)   f32    precomputed fused table
                        o_ref):     # (TB, D)        f32    output tile (contiguous rows)
    tb = pos_ref.shape[0]
    max_len = fused_ref.shape[0]

    # one-hot[t, m] = (pos[t] == m)  -> (TB, max_len); exact 0/1 values, so the
    # MXU matmul below is an exact gather of fused-table rows.
    col = jax.lax.broadcasted_iota(jnp.int32, (tb, max_len), 1)
    onehot = (pos_ref[...] == col).astype(jnp.float32)          # (TB,1) broadcasts over lanes

    # out[t, :] = fused[pos[t], :]  — single MXU matmul, contiguous (TB, D) store.
    o_ref[...] = jnp.dot(onehot, fused_ref[...],
                         preferred_element_type=jnp.float32).astype(o_ref.dtype)


def bio_positional_encoding(pos_ids, scale_embeddings, w_agg, b_agg,
                            *, block_tokens=1024, onehot_vmem_budget=4 << 20):
    """pos_ids [B, T] int32; scale_embeddings: list of S arrays [max_len, D];
    w_agg [D, S*D] (PyTorch nn.Linear weight layout); b_agg [D].  Returns [B, T, D] f32."""
    B, T = pos_ids.shape
    n = B * T
    S = len(scale_embeddings)
    max_len, D = scale_embeddings[0].shape
    assert w_agg.shape == (D, S * D)
    assert b_agg.shape == (D,)

    # Token-tile size: big tiles amortize per-grid-step pipeline overhead (~0.35 us);
    # capped so the (TB, max_len) f32 one-hot stays inside VMEM on every generation
    # (v7x: 64 MiB physical / 32 MiB default scoped).  Keep a multiple of 256
    # (MXU N-width on v6e/v7x; also a multiple of 128 for v5e).
    tb_cap = max(256, (onehot_vmem_budget // (max_len * 4)) // 256 * 256)
    TB = min(block_tokens, tb_cap)
    n_pad = pl.cdiv(n, TB) * TB
    grid = (n_pad // TB,)

    # One-time fused-table precompute (hoisted out of the kernel, plain XLA):
    #   fused[m, :] = concat_s(emb_s[m, :]) @ W.T + b        -> (max_len, D)
    table_cat = jnp.concatenate(scale_embeddings, axis=1).astype(jnp.float32)   # (max_len, S*D)
    fused = (jnp.dot(table_cat, w_agg.T.astype(jnp.float32),
                     precision=jax.lax.Precision.HIGHEST)
             + b_agg.astype(jnp.float32))                                        # (max_len, D)

    # Pad token axis with position 0; padded rows are sliced off below.
    pos_flat = pos_ids.reshape(n).astype(jnp.int32)
    pos_pad = jnp.pad(pos_flat, (0, n_pad - n)).reshape(n_pad, 1)                # (n_pad, 1)

    out = pl.pallas_call(
        _bio_pos_enc_kernel,
        out_shape=jax.ShapeDtypeStruct((n_pad, D), jnp.float32),
        grid=grid,
        in_specs=[
            pl.BlockSpec((TB, 1), lambda i: (i, 0)),           # positions for this tile
            pl.BlockSpec((max_len, D), lambda i: (0, 0)),      # fused table: VMEM-resident
        ],
        out_specs=pl.BlockSpec((TB, D), lambda i: (i, 0)),     # contiguous (TB, D) writeback
        compiler_params=pltpu.CompilerParams(
            dimension_semantics=("parallel",)),                # independent tiles; both TCs on v7x
    )(pos_pad, fused)

    return out[:n].reshape(B, T, D)


def reference(pos_ids, scale_embeddings, w_agg, b_agg):
    gathered = [e[pos_ids] for e in scale_embeddings]          # each [B, T, D]
    combined = jnp.concatenate(gathered, axis=-1)              # [B, T, S*D]
    return combined @ w_agg.T + b_agg                          # [B, T, D]


if __name__ == "__main__":
    # Small, module-consistent shapes.
    d_model = 32
    max_len = 64
    num_scales = 4
    B, T = 2, 8

    key = jax.random.PRNGKey(0)
    keys = jax.random.split(key, num_scales + 3)

    # Deterministic parameter init (shapes per module __init__).
    scale_embeddings = [
        jax.random.normal(keys[s], (max_len, d_model), dtype=jnp.float32)
        for s in range(num_scales)
    ]
    fan_in = num_scales * d_model
    # PyTorch nn.Linear: weight [out, in] = [d_model, num_scales*d_model], bias [d_model].
    w_linear = (jax.random.normal(keys[num_scales], (d_model, fan_in), dtype=jnp.float32)
                * (1.0 / np.sqrt(fan_in)))
    b_linear = (jax.random.normal(keys[num_scales + 1], (d_model,), dtype=jnp.float32)
                * (1.0 / np.sqrt(fan_in)))

    pos_ids = jax.random.randint(keys[num_scales + 2], (B, T), 0, max_len,
                                 dtype=jnp.int32)

    out = bio_positional_encoding(pos_ids, scale_embeddings, w_linear, b_linear)
    out = jax.block_until_ready(out)

    ref = reference(pos_ids, scale_embeddings, w_linear, b_linear)
    assert out.shape == (B, T, d_model)
    np.testing.assert_allclose(np.asarray(out), np.asarray(ref),
                               rtol=1e-5, atol=1e-4)
    print("KERNEL_OK")
</pallas_src>

<mosaic_0001>
module attributes {stable_mosaic.version = 11 : i64} {
  func.func @_bio_pos_enc_kernel(%arg0: i32, %arg1: memref<1024x1xi32, #tpu.memory_space<vmem>>, %arg2: memref<64x32xf32, #tpu.memory_space<vmem>>, %arg3: memref<1024x32xf32, #tpu.memory_space<vmem>>) attributes {dimension_semantics = [#tpu.dimension_semantics<parallel>], iteration_bounds = array<i64: 1>, scalar_prefetch = 0 : i64, scratch_operands = 0 : i64, tpu.core_type = #tpu.core_type<tc>, window_params = [{transform_indices = @transform_0, window_bounds = array<i64: 1024, 1>}, {pipeline_mode = #tpu.pipeline_mode<synchronous>, transform_indices = @transform_1, window_bounds = array<i64: 64, 32>}, {transform_indices = @transform_2, window_bounds = array<i64: 1024, 32>}]} {
    %0 = tpu.iota {dimensions = array<i32: 1>} : vector<1024x64xi32>
    %c0 = arith.constant 0 : index
    %c0_0 = arith.constant 0 : index
    %1 = vector.load %arg1[%c0, %c0_0] : memref<1024x1xi32, #tpu.memory_space<vmem>>, vector<1024x1xi32>
    %2 = vector.broadcast %1 : vector<1024x1xi32> to vector<1024x64xi32>
    %3 = arith.cmpi eq, %2, %0 : vector<1024x64xi32>
    %4 = arith.extui %3 : vector<1024x64xi1> to vector<1024x64xi32>
    %5 = arith.sitofp %4 : vector<1024x64xi32> to vector<1024x64xf32>
    %c0_1 = arith.constant 0 : index
    %c0_2 = arith.constant 0 : index
    %6 = vector.load %arg2[%c0_1, %c0_2] : memref<64x32xf32, #tpu.memory_space<vmem>>, vector<64x32xf32>
    %cst = arith.constant dense<0.000000e+00> : vector<1024x32xf32>
    %7 = tpu.matmul %5, %6, %cst {dimension_numbers = #tpu.dot_dimension_numbers<[1], [0], [0], [1], [0, 0, 1, 1], [], []>} : vector<1024x64xf32>, vector<64x32xf32>, vector<1024x32xf32> -> vector<1024x32xf32>
    %c0_3 = arith.constant 0 : index
    %c0_4 = arith.constant 0 : index
    %8 = vector.load %arg3[%c0_3, %c0_4] : memref<1024x32xf32, #tpu.memory_space<vmem>>, vector<1024x32xf32>
    tpu.vector_store %arg3[%c0_3, %c0_4], %7 {strides = array<i32>} : memref<1024x32xf32, #tpu.memory_space<vmem>>, vector<1024x32xf32>,
    return
  }
  func.func @transform_0(%arg0: i32) -> (i32, i32) {
    %c0_i32 = arith.constant 0 : i32
    %c0_i32_0 = arith.constant 0 : i32
    return %arg0, %c0_i32 : i32, i32
  }
  func.func @transform_1(%arg0: i32) -> (i32, i32) {
    %c0_i32 = arith.constant 0 : i32
    %c0_i32_0 = arith.constant 0 : i32
    %c0_i32_1 = arith.constant 0 : i32
    return %c0_i32, %c0_i32_0 : i32, i32
  }
  func.func @transform_2(%arg0: i32) -> (i32, i32) {
    %c0_i32 = arith.constant 0 : i32
    %c0_i32_0 = arith.constant 0 : i32
    return %arg0, %c0_i32 : i32, i32
  }
}

</mosaic_0001>

<llo_original>
// kernel: tpu_custom_call.1
$region0: #{tpu_custom_call.1}
  #allocation0 [shape = 'u32[]', space=smem, size = 0x4, offset = 0x4, fixed_abs, tag = 'smem constant byte address 0x4 - core index']
  #allocation1 [shape = 'u32[144,128]{1,0:T(1,128)}', space=vmem, size = 0x12000, scoped, tag = 'internal scratch']
  %s0 = inlined_call_operand.vmem [shape: s32[1024,1], index: 0, kind: input, shape index: {}]
  %s1 = inlined_call_operand.vmem [shape: f32[64,32], index: 1, kind: input, shape index: {}]
  %s2 = inlined_call_operand.vmem [shape: f32[1024,32], index: 2, kind: output, shape index: {}]
  %s3 = sld [smem:[#allocation0]]
  $region18: #{tpu_custom_call.1} parent=0
    _
  %s5 = ssub.s32 1, %s3
  %s6 = scalar_select 0, %s5, %s3
  // Predicated region
  $region2: #{tpu_custom_call.1} parent=0 // pred_check
    _
  $region3: #{tpu_custom_call.1} parent=0 // pred_check_branch
    %8 = sbr.rel (0) target = $region5
  $region4: #{tpu_custom_call.1} parent=0 // pred_region
    _
  $region5: #{tpu_custom_call.1} parent=0 // pred_fallthru
    _
  // Predicated region
  $region6: #{tpu_custom_call.1} parent=0 // pred_check
    _
  $region7: #{tpu_custom_call.1} parent=0 // pred_check_branch
    %10 = sbr.rel (0) target = $region9
  $region8: #{tpu_custom_call.1} parent=0 // pred_region
    _
  $region9: #{tpu_custom_call.1} parent=0 // pred_fallthru
    _
  %v11 = vlaneseq
  %v12 = vand.u32 %v11, 127
  %v13 = vld [vmem:[%s0] sm:$0xff]
  %v14 = vld [vmem:[%s0 + $0x8] sm:$0xff]
  %v15 = vld [vmem:[%s0 + $0x10] sm:$0xff]
  %v16 = vld [vmem:[%s0 + $0x18] sm:$0xff]
  %v17 = vld [vmem:[%s0 + $0x20] sm:$0xff]
  %v18 = vld [vmem:[%s0 + $0x28] sm:$0xff]
  %v19 = vld [vmem:[%s0 + $0x30] sm:$0xff]
  %v20 = vld [vmem:[%s0 + $0x38] sm:$0xff]
  %v21 = vld [vmem:[%s0 + $0x40] sm:$0xff]
  %v22 = vld [vmem:[%s0 + $0x48] sm:$0xff]
  %v23 = vld [vmem:[%s0 + $0x50] sm:$0xff]
  %v24 = vld [vmem:[%s0 + $0x58] sm:$0xff]
  %v25 = vld [vmem:[%s0 + $0x60] sm:$0xff]
  %v26 = vld [vmem:[%s0 + $0x68] sm:$0xff]
  %v27 = vld [vmem:[%s0 + $0x70] sm:$0xff]
  %v28 = vld [vmem:[%s0 + $0x78] sm:$0xff]
  %v29 = vld [vmem:[%s0 + $0x80] sm:$0xff]
  %v30 = vld [vmem:[%s0 + $0x88] sm:$0xff]
  %v31 = vld [vmem:[%s0 + $0x90] sm:$0xff]
  %v32 = vld [vmem:[%s0 + $0x98] sm:$0xff]
  %v33 = vld [vmem:[%s0 + $0xa0] sm:$0xff]
  %v34 = vld [vmem:[%s0 + $0xa8] sm:$0xff]
  %v35 = vld [vmem:[%s0 + $0xb0] sm:$0xff]
  %v36 = vld [vmem:[%s0 + $0xb8] sm:$0xff]
  %v37 = vld [vmem:[%s0 + $0xc0] sm:$0xff]
  %v38 = vld [vmem:[%s0 + $0xc8] sm:$0xff]
  %v39 = vld [vmem:[%s0 + $0xd0] sm:$0xff]
  %v40 = vld [vmem:[%s0 + $0xd8] sm:$0xff]
  %v41 = vld [vmem:[%s0 + $0xe0] sm:$0xff]
  %v42 = vld [vmem:[%s0 + $0xe8] sm:$0xff]
  %v43 = vld [vmem:[%s0 + $0xf0] sm:$0xff]
  %v44 = vld [vmem:[%s0 + $0xf8] sm:$0xff]
  %v45 = vld [vmem:[%s0 + $0x100] sm:$0xff]
  %v46 = vld [vmem:[%s0 + $0x108] sm:$0xff]
  %v47 = vld [vmem:[%s0 + $0x110] sm:$0xff]
  %v48 = vld [vmem:[%s0 + $0x118] sm:$0xff]
  %v49 = vld [vmem:[%s0 + $0x120] sm:$0xff]
  %v50 = vld [vmem:[%s0 + $0x128] sm:$0xff]
  %v51 = vld [vmem:[%s0 + $0x130] sm:$0xff]
  %v52 = vld [vmem:[%s0 + $0x138] sm:$0xff]
  %v53 = vld [vmem:[%s0 + $0x140] sm:$0xff]
  %v54 = vld [vmem:[%s0 + $0x148] sm:$0xff]
  %v55 = vld [vmem:[%s0 + $0x150] sm:$0xff]
  %v56 = vld [vmem:[%s0 + $0x158] sm:$0xff]
  %v57 = vld [vmem:[%s0 + $0x160] sm:$0xff]
  %v58 = vld [vmem:[%s0 + $0x168] sm:$0xff]
  %v59 = vld [vmem:[%s0 + $0x170] sm:$0xff]
  %v60 = vld [vmem:[%s0 + $0x178] sm:$0xff]
  %v61 = vld [vmem:[%s0 + $0x180] sm:$0xff]
  %v62 = vld [vmem:[%s0 + $0x188] sm:$0xff]
  %v63 = vld [vmem:[%s0 + $0x190] sm:$0xff]
  %v64 = vld [vmem:[%s0 + $0x198] sm:$0xff]
  %v65 = vld [vmem:[%s0 + $0x1a0] sm:$0xff]
  %v66 = vld [vmem:[%s0 + $0x1a8] sm:$0xff]
  %v67 = vld [vmem:[%s0 + $0x1b0] sm:$0xff]
  %v68 = vld [vmem:[%s0 + $0x1b8] sm:$0xff]
  %v69 = vld [vmem:[%s0 + $0x1c0] sm:$0xff]
  %v70 = vld [vmem:[%s0 + $0x1c8] sm:$0xff]
  %v71 = vld [vmem:[%s0 + $0x1d0] sm:$0xff]
  %v72 = vld [vmem:[%s0 + $0x1d8] sm:$0xff]
  %v73 = vld [vmem:[%s0 + $0x1e0] sm:$0xff]
  %v74 = vld [vmem:[%s0 + $0x1e8] sm:$0xff]
  %v75 = vld [vmem:[%s0 + $0x1f0] sm:$0xff]
  %v76 = vld [vmem:[%s0 + $0x1f8] sm:$0xff]
  %v77 = vld [vmem:[%s0 + $0x200] sm:$0xff]
  %v78 = vld [vmem:[%s0 + $0x208] sm:$0xff]
  %v79 = vld [vmem:[%s0 + $0x210] sm:$0xff]
  %v80 = vld [vmem:[%s0 + $0x218] sm:$0xff]
  %v81 = vld [vmem:[%s0 + $0x220] sm:$0xff]
  %v82 = vld [vmem:[%s0 + $0x228] sm:$0xff]
  %v83 = vld [vmem:[%s0 + $0x230] sm:$0xff]
  %v84 = vld [vmem:[%s0 + $0x238] sm:$0xff]
  %v85 = vld [vmem:[%s0 + $0x240] sm:$0xff]
  %v86 = vld [vmem:[%s0 + $0x248] sm:$0xff]
  %v87 = vld [vmem:[%s0 + $0x250] sm:$0xff]
  %v88 = vld [vmem:[%s0 + $0x258] sm:$0xff]
  %v89 = vld [vmem:[%s0 + $0x260] sm:$0xff]
  %v90 = vld [vmem:[%s0 + $0x268] sm:$0xff]
  %v91 = vld [vmem:[%s0 + $0x270] sm:$0xff]
  %v92 = vld [vmem:[%s0 + $0x278] sm:$0xff]
  %v93 = vld [vmem:[%s0 + $0x280] sm:$0xff]
  %v94 = vld [vmem:[%s0 + $0x288] sm:$0xff]
  %v95 = vld [vmem:[%s0 + $0x290] sm:$0xff]
  %v96 = vld [vmem:[%s0 + $0x298] sm:$0xff]
  %v97 = vld [vmem:[%s0 + $0x2a0] sm:$0xff]
  %v98 = vld [vmem:[%s0 + $0x2a8] sm:$0xff]
  %v99 = vld [vmem:[%s0 + $0x2b0] sm:$0xff]
  %v100 = vld [vmem:[%s0 + $0x2b8] sm:$0xff]
  %v101 = vld [vmem:[%s0 + $0x2c0] sm:$0xff]
  %v102 = vld [vmem:[%s0 + $0x2c8] sm:$0xff]
  %v103 = vld [vmem:[%s0 + $0x2d0] sm:$0xff]
  %v104 = vld [vmem:[%s0 + $0x2d8] sm:$0xff]
  %v105 = vld [vmem:[%s0 + $0x2e0] sm:$0xff]
  %v106 = vld [vmem:[%s0 + $0x2e8] sm:$0xff]
  %v107 = vld [vmem:[%s0 + $0x2f0] sm:$0xff]
  %v108 = vld [vmem:[%s0 + $0x2f8] sm:$0xff]
  %v109 = vld [vmem:[%s0 + $0x300] sm:$0xff]
  %v110 = vld [vmem:[%s0 + $0x308] sm:$0xff]
  %v111 = vld [vmem:[%s0 + $0x310] sm:$0xff]
  %v112 = vld [vmem:[%s0 + $0x318] sm:$0xff]
  %v113 = vld [vmem:[%s0 + $0x320] sm:$0xff]
  %v114 = vld [vmem:[%s0 + $0x328] sm:$0xff]
  %v115 = vld [vmem:[%s0 + $0x330] sm:$0xff]
  %v116 = vld [vmem:[%s0 + $0x338] sm:$0xff]
  %v117 = vld [vmem:[%s0 + $0x340] sm:$0xff]
  %v118 = vld [vmem:[%s0 + $0x348] sm:$0xff]
  %v119 = vld [vmem:[%s0 + $0x350] sm:$0xff]
  %v120 = vld [vmem:[%s0 + $0x358] sm:$0xff]
  %v121 = vld [vmem:[%s0 + $0x360] sm:$0xff]
  %v122 = vld [vmem:[%s0 + $0x368] sm:$0xff]
  %v123 = vld [vmem:[%s0 + $0x370] sm:$0xff]
  %v124 = vld [vmem:[%s0 + $0x378] sm:$0xff]
  %v125 = vld [vmem:[%s0 + $0x380] sm:$0xff]
  %v126 = vld [vmem:[%s0 + $0x388] sm:$0xff]
  %v127 = vld [vmem:[%s0 + $0x390] sm:$0xff]
  %v128 = vld [vmem:[%s0 + $0x398] sm:$0xff]
  %v129 = vld [vmem:[%s0 + $0x3a0] sm:$0xff]
  %v130 = vld [vmem:[%s0 + $0x3a8] sm:$0xff]
  %v131 = vld [vmem:[%s0 + $0x3b0] sm:$0xff]
  %v132 = vld [vmem:[%s0 + $0x3b8] sm:$0xff]
  %v133 = vld [vmem:[%s0 + $0x3c0] sm:$0xff]
  %v134 = vld [vmem:[%s0 + $0x3c8] sm:$0xff]
  %v135 = vld [vmem:[%s0 + $0x3d0] sm:$0xff]
  %v136 = vld [vmem:[%s0 + $0x3d8] sm:$0xff]
  %v137 = vld [vmem:[%s0 + $0x3e0] sm:$0xff]
  %v138 = vld [vmem:[%s0 + $0x3e8] sm:$0xff]
  %v139 = vld [vmem:[%s0 + $0x3f0] sm:$0xff]
  %v140 = vld [vmem:[%s0 + $0x3f8] sm:$0xff]
  %141 = vset.pattern.permute.xlu0 0
  %142 = vperm.xlu0 %141, %v13
  %v143 = vpop.permute.xlu0 %142
  %144 = vset.pattern.permute.xlu0 0
  %145 = vperm.xlu0 %144, %v14
  %v146 = vpop.permute.xlu0 %145
  %147 = vset.pattern.permute.xlu0 0
  %148 = vperm.xlu0 %147, %v15
  %v149 = vpop.permute.xlu0 %148
  %150 = vset.pattern.permute.xlu0 0
  %151 = vperm.xlu0 %150, %v16
  %v152 = vpop.permute.xlu0 %151
  %153 = vset.pattern.permute.xlu0 0
  %154 = vperm.xlu0 %153, %v17
  %v155 = vpop.permute.xlu0 %154
  %156 = vset.pattern.permute.xlu0 0
  %157 = vperm.xlu0 %156, %v18
  %v158 = vpop.permute.xlu0 %157
  %159 = vset.pattern.permute.xlu0 0
  %160 = vperm.xlu0 %159, %v19
  %v161 = vpop.permute.xlu0 %160
  %162 = vset.pattern.permute.xlu0 0
  %163 = vperm.xlu0 %162, %v20
  %v164 = vpop.permute.xlu0 %163
  %165 = vset.pattern.permute.xlu0 0
  %166 = vperm.xlu0 %165, %v21
  %v167 = vpop.permute.xlu0 %166
  %168 = vset.pattern.permute.xlu0 0
  %169 = vperm.xlu0 %168, %v22
  %v170 = vpop.permute.xlu0 %169
  %171 = vset.pattern.permute.xlu0 0
  %172 = vperm.xlu0 %171, %v23
  %v173 = vpop.permute.xlu0 %172
  %174 = vset.pattern.permute.xlu0 0
  %175 = vperm.xlu0 %174, %v24
  %v176 = vpop.permute.xlu0 %175
  %177 = vset.pattern.permute.xlu0 0
  %178 = vperm.xlu0 %177, %v25
  %v179 = vpop.permute.xlu0 %178
  %180 = vset.pattern.permute.xlu0 0
  %181 = vperm.xlu0 %180, %v26
  %v182 = vpop.permute.xlu0 %181
  %183 = vset.pattern.permute.xlu0 0
  %184 = vperm.xlu0 %183, %v27
  %v185 = vpop.permute.xlu0 %184
  %186 = vset.pattern.permute.xlu0 0
  %187 = vperm.xlu0 %186, %v28
  %v188 = vpop.permute.xlu0 %187
  %189 = vset.pattern.permute.xlu0 0
  %190 = vperm.xlu0 %189, %v29
  %v191 = vpop.permute.xlu0 %190
  %192 = vset.pattern.permute.xlu0 0
  %193 = vperm.xlu0 %192, %v30
  %v194 = vpop.permute.xlu0 %193
  %195 = vset.pattern.permute.xlu0 0
  %196 = vperm.xlu0 %195, %v31
  %v197 = vpop.permute.xlu0 %196
  %198 = vset.pattern.permute.xlu0 0
  %199 = vperm.xlu0 %198, %v32
  %v200 = vpop.permute.xlu0 %199
  %201 = vset.pattern.permute.xlu0 0
  %202 = vperm.xlu0 %201, %v33
  %v203 = vpop.permute.xlu0 %202
  %204 = vset.pattern.permute.xlu0 0
  %205 = vperm.xlu0 %204, %v34
  %v206 = vpop.permute.xlu0 %205
  %207 = vset.pattern.permute.xlu0 0
  %208 = vperm.xlu0 %207, %v35
  %v209 = vpop.permute.xlu0 %208
  %210 = vset.pattern.permute.xlu0 0
  %211 = vperm.xlu0 %210, %v36
  %v212 = vpop.permute.xlu0 %211
  %213 = vset.pattern.permute.xlu0 0
  %214 = vperm.xlu0 %213, %v37
  %v215 = vpop.permute.xlu0 %214
  %216 = vset.pattern.permute.xlu0 0
  %217 = vperm.xlu0 %216, %v38
  %v218 = vpop.permute.xlu0 %217
  %219 = vset.pattern.permute.xlu0 0
  %220 = vperm.xlu0 %219, %v39
  %v221 = vpop.permute.xlu0 %220
  %222 = vset.pattern.permute.xlu0 0
  %223 = vperm.xlu0 %222, %v40
  %v224 = vpop.permute.xlu0 %223
  %225 = vset.pattern.permute.xlu0 0
  %226 = vperm.xlu0 %225, %v41
  %v227 = vpop.permute.xlu0 %226
  %228 = vset.pattern.permute.xlu0 0
  %229 = vperm.xlu0 %228, %v42
  %v230 = vpop.permute.xlu0 %229
  %231 = vset.pattern.permute.xlu0 0
  %232 = vperm.xlu0 %231, %v43
  %v233 = vpop.permute.xlu0 %232
  %234 = vset.pattern.permute.xlu0 0
  %235 = vperm.xlu0 %234, %v44
  %v236 = vpop.permute.xlu0 %235
  %237 = vset.pattern.permute.xlu0 0
  %238 = vperm.xlu0 %237, %v45
  %v239 = vpop.permute.xlu0 %238
  %240 = vset.pattern.permute.xlu0 0
  %241 = vperm.xlu0 %240, %v46
  %v242 = vpop.permute.xlu0 %241
  %243 = vset.pattern.permute.xlu0 0
  %244 = vperm.xlu0 %243, %v47
  %v245 = vpop.permute.xlu0 %244
  %246 = vset.pattern.permute.xlu0 0
  %247 = vperm.xlu0 %246, %v48
  %v248 = vpop.permute.xlu0 %247
  %249 = vset.pattern.permute.xlu0 0
  %250 = vperm.xlu0 %249, %v49
  %v251 = vpop.permute.xlu0 %250
  %252 = vset.pattern.permute.xlu0 0
  %253 = vperm.xlu0 %252, %v50
  %v254 = vpop.permute.xlu0 %253
  %255 = vset.pattern.permute.xlu0 0
  %256 = vperm.xlu0 %255, %v51
  %v257 = vpop.permute.xlu0 %256
  %258 = vset.pattern.permute.xlu0 0
  %259 = vperm.xlu0 %258, %v52
  %v260 = vpop.permute.xlu0 %259
  %261 = vset.pattern.permute.xlu0 0
  %262 = vperm.xlu0 %261, %v53
  %v263 = vpop.permute.xlu0 %262
  %264 = vset.pattern.permute.xlu0 0
  %265 = vperm.xlu0 %264, %v54
  %v266 = vpop.permute.xlu0 %265
  %267 = vset.pattern.permute.xlu0 0
  %268 = vperm.xlu0 %267, %v55
  %v269 = vpop.permute.xlu0 %268
  %270 = vset.pattern.permute.xlu0 0
  %271 = vperm.xlu0 %270, %v56
  %v272 = vpop.permute.xlu0 %271
  %273 = vset.pattern.permute.xlu0 0
  %274 = vperm.xlu0 %273, %v57
  %v275 = vpop.permute.xlu0 %274
  %276 = vset.pattern.permute.xlu0 0
  %277 = vperm.xlu0 %276, %v58
  %v278 = vpop.permute.xlu0 %277
  %279 = vset.pattern.permute.xlu0 0
  %280 = vperm.xlu0 %279, %v59
  %v281 = vpop.permute.xlu0 %280
  %282 = vset.pattern.permute.xlu0 0
  %283 = vperm.xlu0 %282, %v60
  %v284 = vpop.permute.xlu0 %283
  %285 = vset.pattern.permute.xlu0 0
  %286 = vperm.xlu0 %285, %v61
  %v287 = vpop.permute.xlu0 %286
  %288 = vset.pattern.permute.xlu0 0
  %289 = vperm.xlu0 %288, %v62
  %v290 = vpop.permute.xlu0 %289
  %291 = vset.pattern.permute.xlu0 0
  %292 = vperm.xlu0 %291, %v63
  %v293 = vpop.permute.xlu0 %292
  %294 = vset.pattern.permute.xlu0 0
  %295 = vperm.xlu0 %294, %v64
  %v296 = vpop.permute.xlu0 %295
  %297 = vset.pattern.permute.xlu0 0
  %298 = vperm.xlu0 %297, %v65
  %v299 = vpop.permute.xlu0 %298
  %300 = vset.pattern.permute.xlu0 0
  %301 = vperm.xlu0 %300, %v66
  %v302 = vpop.permute.xlu0 %301
  %303 = vset.pattern.permute.xlu0 0
  %304 = vperm.xlu0 %303, %v67
  %v305 = vpop.permute.xlu0 %304
  %306 = vset.pattern.permute.xlu0 0
  %307 = vperm.xlu0 %306, %v68
  %v308 = vpop.permute.xlu0 %307
  %309 = vset.pattern.permute.xlu0 0
  %310 = vperm.xlu0 %309, %v69
  %v311 = vpop.permute.xlu0 %310
  %312 = vset.pattern.permute.xlu0 0
  %313 = vperm.xlu0 %312, %v70
  %v314 = vpop.permute.xlu0 %313
  %315 = vset.pattern.permute.xlu0 0
  %316 = vperm.xlu0 %315, %v71
  %v317 = vpop.permute.xlu0 %316
  %318 = vset.pattern.permute.xlu0 0
  %319 = vperm.xlu0 %318, %v72
  %v320 = vpop.permute.xlu0 %319
  %321 = vset.pattern.permute.xlu0 0
  %322 = vperm.xlu0 %321, %v73
  %v323 = vpop.permute.xlu0 %322
  %324 = vset.pattern.permute.xlu0 0
  %325 = vperm.xlu0 %324, %v74
  %v326 = vpop.permute.xlu0 %325
  %327 = vset.pattern.permute.xlu0 0
  %328 = vperm.xlu0 %327, %v75
  %v329 = vpop.permute.xlu0 %328
  %330 = vset.pattern.permute.xlu0 0
  %331 = vperm.xlu0 %330, %v76
  %v332 = vpop.permute.xlu0 %331
  %333 = vset.pattern.permute.xlu0 0
  %334 = vperm.xlu0 %333, %v77
  %v335 = vpop.permute.xlu0 %334
  %336 = vset.pattern.permute.xlu0 0
  %337 = vperm.xlu0 %336, %v78
  %v338 = vpop.permute.xlu0 %337
  %339 = vset.pattern.permute.xlu0 0
  %340 = vperm.xlu0 %339, %v79
  %v341 = vpop.permute.xlu0 %340
  %342 = vset.pattern.permute.xlu0 0
  %343 = vperm.xlu0 %342, %v80
  %v344 = vpop.permute.xlu0 %343
  %345 = vset.pattern.permute.xlu0 0
  %346 = vperm.xlu0 %345, %v81
  %v347 = vpop.permute.xlu0 %346
  %348 = vset.pattern.permute.xlu0 0
  %349 = vperm.xlu0 %348, %v82
  %v350 = vpop.permute.xlu0 %349
  %351 = vset.pattern.permute.xlu0 0
  %352 = vperm.xlu0 %351, %v83
  %v353 = vpop.permute.xlu0 %352
  %354 = vset.pattern.permute.xlu0 0
  %355 = vperm.xlu0 %354, %v84
  %v356 = vpop.permute.xlu0 %355
  %357 = vset.pattern.permute.xlu0 0
  %358 = vperm.xlu0 %357, %v85
  %v359 = vpop.permute.xlu0 %358
  %360 = vset.pattern.permute.xlu0 0
  %361 = vperm.xlu0 %360, %v86
  %v362 = vpop.permute.xlu0 %361
  %363 = vset.pattern.permute.xlu0 0
  %364 = vperm.xlu0 %363, %v87
  %v365 = vpop.permute.xlu0 %364
  %366 = vset.pattern.permute.xlu0 0
  %367 = vperm.xlu0 %366, %v88
  %v368 = vpop.permute.xlu0 %367
  %369 = vset.pattern.permute.xlu0 0
  %370 = vperm.xlu0 %369, %v89
  %v371 = vpop.permute.xlu0 %370
  %372 = vset.pattern.permute.xlu0 0
  %373 = vperm.xlu0 %372, %v90
  %v374 = vpop.permute.xlu0 %373
  %375 = vset.pattern.permute.xlu0 0
  %376 = vperm.xlu0 %375, %v91
  %v377 = vpop.permute.xlu0 %376
  %378 = vset.pattern.permute.xlu0 0
  %379 = vperm.xlu0 %378, %v92
  %v380 = vpop.permute.xlu0 %379
  %381 = vset.pattern.permute.xlu0 0
  %382 = vperm.xlu0 %381, %v93
  %v383 = vpop.permute.xlu0 %382
  %384 = vset.pattern.permute.xlu0 0
  %385 = vperm.xlu0 %384, %v94
  %v386 = vpop.permute.xlu0 %385
  %387 = vset.pattern.permute.xlu0 0
  %388 = vperm.xlu0 %387, %v95
  %v389 = vpop.permute.xlu0 %388
  %390 = vset.pattern.permute.xlu0 0
  %391 = vperm.xlu0 %390, %v96
  %v392 = vpop.permute.xlu0 %391
  %393 = vset.pattern.permute.xlu0 0
  %394 = vperm.xlu0 %393, %v97
  %v395 = vpop.permute.xlu0 %394
  %396 = vset.pattern.permute.xlu0 0
  %397 = vperm.xlu0 %396, %v98
  %v398 = vpop.permute.xlu0 %397
  %399 = vset.pattern.permute.xlu0 0
  %400 = vperm.xlu0 %399, %v99
  %v401 = vpop.permute.xlu0 %400
  %402 = vset.pattern.permute.xlu0 0
  %403 = vperm.xlu0 %402, %v100
  %v404 = vpop.permute.xlu0 %403
  %405 = vset.pattern.permute.xlu0 0
  %406 = vperm.xlu0 %405, %v101
  %v407 = vpop.permute.xlu0 %406
  %408 = vset.pattern.permute.xlu0 0
  %409 = vperm.xlu0 %408, %v102
  %v410 = vpop.permute.xlu0 %409
  %411 = vset.pattern.permute.xlu0 0
  %412 = vperm.xlu0 %411, %v103
  %v413 = vpop.permute.xlu0 %412
  %414 = vset.pattern.permute.xlu0 0
  %415 = vperm.xlu0 %414, %v104
  %v416 = vpop.permute.xlu0 %415
  %417 = vset.pattern.permute.xlu0 0
  %418 = vperm.xlu0 %417, %v105
  %v419 = vpop.permute.xlu0 %418
  %420 = vset.pattern.permute.xlu0 0
  %421 = vperm.xlu0 %420, %v106
  %v422 = vpop.permute.xlu0 %421
  %423 = vset.pattern.permute.xlu0 0
  %424 = vperm.xlu0 %423, %v107
  %v425 = vpop.permute.xlu0 %424
  %426 = vset.pattern.permute.xlu0 0
  %427 = vperm.xlu0 %426, %v108
  %v428 = vpop.permute.xlu0 %427
  %429 = vset.pattern.permute.xlu0 0
  %430 = vperm.xlu0 %429, %v109
  %v431 = vpop.permute.xlu0 %430
  %432 = vset.pattern.permute.xlu0 0
  %433 = vperm.xlu0 %432, %v110
  %v434 = vpop.permute.xlu0 %433
  %435 = vset.pattern.permute.xlu0 0
  %436 = vperm.xlu0 %435, %v111
  %v437 = vpop.permute.xlu0 %436
  %438 = vset.pattern.permute.xlu0 0
  %439 = vperm.xlu0 %438, %v112
  %v440 = vpop.permute.xlu0 %439
  %441 = vset.pattern.permute.xlu0 0
  %442 = vperm.xlu0 %441, %v113
  %v443 = vpop.permute.xlu0 %442
  %444 = vset.pattern.permute.xlu0 0
  %445 = vperm.xlu0 %444, %v114
  %v446 = vpop.permute.xlu0 %445
  %447 = vset.pattern.permute.xlu0 0
  %448 = vperm.xlu0 %447, %v115
  %v449 = vpop.permute.xlu0 %448
  %450 = vset.pattern.permute.xlu0 0
  %451 = vperm.xlu0 %450, %v116
  %v452 = vpop.permute.xlu0 %451
  %453 = vset.pattern.permute.xlu0 0
  %454 = vperm.xlu0 %453, %v117
  %v455 = vpop.permute.xlu0 %454
  %456 = vset.pattern.permute.xlu0 0
  %457 = vperm.xlu0 %456, %v118
  %v458 = vpop.permute.xlu0 %457
  %459 = vset.pattern.permute.xlu0 0
  %460 = vperm.xlu0 %459, %v119
  %v461 = vpop.permute.xlu0 %460
  %462 = vset.pattern.permute.xlu0 0
  %463 = vperm.xlu0 %462, %v120
  %v464 = vpop.permute.xlu0 %463
  %465 = vset.pattern.permute.xlu0 0
  %466 = vperm.xlu0 %465, %v121
  %v467 = vpop.permute.xlu0 %466
  %468 = vset.pattern.permute.xlu0 0
  %469 = vperm.xlu0 %468, %v122
  %v470 = vpop.permute.xlu0 %469
  %471 = vset.pattern.permute.xlu0 0
  %472 = vperm.xlu0 %471, %v123
  %v473 = vpop.permute.xlu0 %472
  %474 = vset.pattern.permute.xlu0 0
  %475 = vperm.xlu0 %474, %v124
  %v476 = vpop.permute.xlu0 %475
  %477 = vset.pattern.permute.xlu0 0
  %478 = vperm.xlu0 %477, %v125
  %v479 = vpop.permute.xlu0 %478
  %480 = vset.pattern.permute.xlu0 0
  %481 = vperm.xlu0 %480, %v126
  %v482 = vpop.permute.xlu0 %481
  %483 = vset.pattern.permute.xlu0 0
  %484 = vperm.xlu0 %483, %v127
  %v485 = vpop.permute.xlu0 %484
  %486 = vset.pattern.permute.xlu0 0
  %487 = vperm.xlu0 %486, %v128
  %v488 = vpop.permute.xlu0 %487
  %489 = vset.pattern.permute.xlu0 0
  %490 = vperm.xlu0 %489, %v129
  %v491 = vpop.permute.xlu0 %490
  %492 = vset.pattern.permute.xlu0 0
  %493 = vperm.xlu0 %492, %v130
  %v494 = vpop.permute.xlu0 %493
  %495 = vset.pattern.permute.xlu0 0
  %496 = vperm.xlu0 %495, %v131
  %v497 = vpop.permute.xlu0 %496
  %498 = vset.pattern.permute.xlu0 0
  %499 = vperm.xlu0 %498, %v132
  %v500 = vpop.permute.xlu0 %499
  %501 = vset.pattern.permute.xlu0 0
  %502 = vperm.xlu0 %501, %v133
  %v503 = vpop.permute.xlu0 %502
  %504 = vset.pattern.permute.xlu0 0
  %505 = vperm.xlu0 %504, %v134
  %v506 = vpop.permute.xlu0 %505
  %507 = vset.pattern.permute.xlu0 0
  %508 = vperm.xlu0 %507, %v135
  %v509 = vpop.permute.xlu0 %508
  %510 = vset.pattern.permute.xlu0 0
  %511 = vperm.xlu0 %510, %v136
  %v512 = vpop.permute.xlu0 %511
  %513 = vset.pattern.permute.xlu0 0
  %514 = vperm.xlu0 %513, %v137
  %v515 = vpop.permute.xlu0 %514
  %516 = vset.pattern.permute.xlu0 0
  %517 = vperm.xlu0 %516, %v138
  %v518 = vpop.permute.xlu0 %517
  %519 = vset.pattern.permute.xlu0 0
  %520 = vperm.xlu0 %519, %v139
  %v521 = vpop.permute.xlu0 %520
  %522 = vset.pattern.permute.xlu0 0
  %523 = vperm.xlu0 %522, %v140
  %v524 = vpop.permute.xlu0 %523
  %vm525 = vcmp.eq.s32.totalorder %v143, %v12
  %vm526 = vcmp.eq.s32.totalorder %v146, %v12
  %vm527 = vcmp.eq.s32.totalorder %v149, %v12
  %vm528 = vcmp.eq.s32.totalorder %v152, %v12
  %vm529 = vcmp.eq.s32.totalorder %v155, %v12
  %vm530 = vcmp.eq.s32.totalorder %v158, %v12
  %vm531 = vcmp.eq.s32.totalorder %v161, %v12
  %vm532 = vcmp.eq.s32.totalorder %v164, %v12
  %vm533 = vcmp.eq.s32.totalorder %v167, %v12
  %vm534 = vcmp.eq.s32.totalorder %v170, %v12
  %vm535 = vcmp.eq.s32.totalorder %v173, %v12
  %vm536 = vcmp.eq.s32.totalorder %v176, %v12
  %vm537 = vcmp.eq.s32.totalorder %v179, %v12
  %vm538 = vcmp.eq.s32.totalorder %v182, %v12
  %vm539 = vcmp.eq.s32.totalorder %v185, %v12
  %vm540 = vcmp.eq.s32.totalorder %v188, %v12
  %vm541 = vcmp.eq.s32.totalorder %v191, %v12
  %vm542 = vcmp.eq.s32.totalorder %v194, %v12
  %vm543 = vcmp.eq.s32.totalorder %v197, %v12
  %vm544 = vcmp.eq.s32.totalorder %v200, %v12
  %vm545 = vcmp.eq.s32.totalorder %v203, %v12
  %vm546 = vcmp.eq.s32.totalorder %v206, %v12
  %vm547 = vcmp.eq.s32.totalorder %v209, %v12
  %vm548 = vcmp.eq.s32.totalorder %v212, %v12
  %vm549 = vcmp.eq.s32.totalorder %v215, %v12
  %vm550 = vcmp.eq.s32.totalorder %v218, %v12
  %vm551 = vcmp.eq.s32.totalorder %v221, %v12
  %vm552 = vcmp.eq.s32.totalorder %v224, %v12
  %vm553 = vcmp.eq.s32.totalorder %v227, %v12
  %vm554 = vcmp.eq.s32.totalorder %v230, %v12
  %vm555 = vcmp.eq.s32.totalorder %v233, %v12
  %vm556 = vcmp.eq.s32.totalorder %v236, %v12
  %vm557 = vcmp.eq.s32.totalorder %v239, %v12
  %vm558 = vcmp.eq.s32.totalorder %v242, %v12
  %vm559 = vcmp.eq.s32.totalorder %v245, %v12
  %vm560 = vcmp.eq.s32.totalorder %v248, %v12
  %vm561 = vcmp.eq.s32.totalorder %v251, %v12
  %vm562 = vcmp.eq.s32.totalorder %v254, %v12
  %vm563 = vcmp.eq.s32.totalorder %v257, %v12
  %vm564 = vcmp.eq.s32.totalorder %v260, %v12
  %vm565 = vcmp.eq.s32.totalorder %v263, %v12
  %vm566 = vcmp.eq.s32.totalorder %v266, %v12
  %vm567 = vcmp.eq.s32.totalorder %v269, %v12
  %vm568 = vcmp.eq.s32.totalorder %v272, %v12
  %vm569 = vcmp.eq.s32.totalorder %v275, %v12
  %vm570 = vcmp.eq.s32.totalorder %v278, %v12
  %vm571 = vcmp.eq.s32.totalorder %v281, %v12
  %vm572 = vcmp.eq.s32.totalorder %v284, %v12
  %vm573 = vcmp.eq.s32.totalorder %v287, %v12
  %vm574 = vcmp.eq.s32.totalorder %v290, %v12
  %vm575 = vcmp.eq.s32.totalorder %v293, %v12
  %vm576 = vcmp.eq.s32.totalorder %v296, %v12
  %vm577 = vcmp.eq.s32.totalorder %v299, %v12
  %vm578 = vcmp.eq.s32.totalorder %v302, %v12
  %vm579 = vcmp.eq.s32.totalorder %v305, %v12
  %vm580 = vcmp.eq.s32.totalorder %v308, %v12
  %vm581 = vcmp.eq.s32.totalorder %v311, %v12
  %vm582 = vcmp.eq.s32.totalorder %v314, %v12
  %vm583 = vcmp.eq.s32.totalorder %v317, %v12
  %vm584 = vcmp.eq.s32.totalorder %v320, %v12
  %vm585 = vcmp.eq.s32.totalorder %v323, %v12
  %vm586 = vcmp.eq.s32.totalorder %v326, %v12
  %vm587 = vcmp.eq.s32.totalorder %v329, %v12
  %vm588 = vcmp.eq.s32.totalorder %v332, %v12
  %vm589 = vcmp.eq.s32.totalorder %v335, %v12
  %vm590 = vcmp.eq.s32.totalorder %v338, %v12
  %vm591 = vcmp.eq.s32.totalorder %v341, %v12
  %vm592 = vcmp.eq.s32.totalorder %v344, %v12
  %vm593 = vcmp.eq.s32.totalorder %v347, %v12
  %vm594 = vcmp.eq.s32.totalorder %v350, %v12
  %vm595 = vcmp.eq.s32.totalorder %v353, %v12
  %vm596 = vcmp.eq.s32.totalorder %v356, %v12
  %vm597 = vcmp.eq.s32.totalorder %v359, %v12
  %vm598 = vcmp.eq.s32.totalorder %v362, %v12
  %vm599 = vcmp.eq.s32.totalorder %v365, %v12
  %vm600 = vcmp.eq.s32.totalorder %v368, %v12
  %vm601 = vcmp.eq.s32.totalorder %v371, %v12
  %vm602 = vcmp.eq.s32.totalorder %v374, %v12
  %vm603 = vcmp.eq.s32.totalorder %v377, %v12
  %vm604 = vcmp.eq.s32.totalorder %v380, %v12
  %vm605 = vcmp.eq.s32.totalorder %v383, %v12
  %vm606 = vcmp.eq.s32.totalorder %v386, %v12
  %vm607 = vcmp.eq.s32.totalorder %v389, %v12
  %vm608 = vcmp.eq.s32.totalorder %v392, %v12
  %vm609 = vcmp.eq.s32.totalorder %v395, %v12
  %vm610 = vcmp.eq.s32.totalorder %v398, %v12
  %vm611 = vcmp.eq.s32.totalorder %v401, %v12
  %vm612 = vcmp.eq.s32.totalorder %v404, %v12
  %vm613 = vcmp.eq.s32.totalorder %v407, %v12
  %vm614 = vcmp.eq.s32.totalorder %v410, %v12
  %vm615 = vcmp.eq.s32.totalorder %v413, %v12
  %vm616 = vcmp.eq.s32.totalorder %v416, %v12
  %vm617 = vcmp.eq.s32.totalorder %v419, %v12
  %vm618 = vcmp.eq.s32.totalorder %v422, %v12
  %vm619 = vcmp.eq.s32.totalorder %v425, %v12
  %vm620 = vcmp.eq.s32.totalorder %v428, %v12
  %vm621 = vcmp.eq.s32.totalorder %v431, %v12
  %vm622 = vcmp.eq.s32.totalorder %v434, %v12
  %vm623 = vcmp.eq.s32.totalorder %v437, %v12
  %vm624 = vcmp.eq.s32.totalorder %v440, %v12
  %vm625 = vcmp.eq.s32.totalorder %v443, %v12
  %vm626 = vcmp.eq.s32.totalorder %v446, %v12
  %vm627 = vcmp.eq.s32.totalorder %v449, %v12
  %vm628 = vcmp.eq.s32.totalorder %v452, %v12
  %vm629 = vcmp.eq.s32.totalorder %v455, %v12
  %vm630 = vcmp.eq.s32.totalorder %v458, %v12
  %vm631 = vcmp.eq.s32.totalorder %v461, %v12
  %vm632 = vcmp.eq.s32.totalorder %v464, %v12
  %vm633 = vcmp.eq.s32.totalorder %v467, %v12
  %vm634 = vcmp.eq.s32.totalorder %v470, %v12
  %vm635 = vcmp.eq.s32.totalorder %v473, %v12
  %vm636 = vcmp.eq.s32.totalorder %v476, %v12
  %vm637 = vcmp.eq.s32.totalorder %v479, %v12
  %vm638 = vcmp.eq.s32.totalorder %v482, %v12
  %vm639 = vcmp.eq.s32.totalorder %v485, %v12
  %vm640 = vcmp.eq.s32.totalorder %v488, %v12
  %vm641 = vcmp.eq.s32.totalorder %v491, %v12
  %vm642 = vcmp.eq.s32.totalorder %v494, %v12
  %vm643 = vcmp.eq.s32.totalorder %v497, %v12
  %vm644 = vcmp.eq.s32.totalorder %v500, %v12
  %vm645 = vcmp.eq.s32.totalorder %v503, %v12
  %vm646 = vcmp.eq.s32.totalorder %v506, %v12
  %vm647 = vcmp.eq.s32.totalorder %v509, %v12
  %vm648 = vcmp.eq.s32.totalorder %v512, %v12
  %vm649 = vcmp.eq.s32.totalorder %v515, %v12
  %vm650 = vcmp.eq.s32.totalorder %v518, %v12
  %vm651 = vcmp.eq.s32.totalorder %v521, %v12
  %vm652 = vcmp.eq.s32.totalorder %v524, %v12
  %v653 = vsel %vm525, 1, 0
  %v654 = vsel %vm526, 1, 0
  %v655 = vsel %vm527, 1, 0
  %v656 = vsel %vm528, 1, 0
  %v657 = vsel %vm529, 1, 0
  %v658 = vsel %vm530, 1, 0
  %v659 = vsel %vm531, 1, 0
  %v660 = vsel %vm532, 1, 0
  %v661 = vsel %vm533, 1, 0
  %v662 = vsel %vm534, 1, 0
  %v663 = vsel %vm535, 1, 0
  %v664 = vsel %vm536, 1, 0
  %v665 = vsel %vm537, 1, 0
  %v666 = vsel %vm538, 1, 0
  %v667 = vsel %vm539, 1, 0
  %v668 = vsel %vm540, 1, 0
  %v669 = vsel %vm541, 1, 0
  %v670 = vsel %vm542, 1, 0
  %v671 = vsel %vm543, 1, 0
  %v672 = vsel %vm544, 1, 0
  %v673 = vsel %vm545, 1, 0
  %v674 = vsel %vm546, 1, 0
  %v675 = vsel %vm547, 1, 0
  %v676 = vsel %vm548, 1, 0
  %v677 = vsel %vm549, 1, 0
  %v678 = vsel %vm550, 1, 0
  %v679 = vsel %vm551, 1, 0
  %v680 = vsel %vm552, 1, 0
  %v681 = vsel %vm553, 1, 0
  %v682 = vsel %vm554, 1, 0
  %v683 = vsel %vm555, 1, 0
  %v684 = vsel %vm556, 1, 0
  %v685 = vsel %vm557, 1, 0
  %v686 = vsel %vm558, 1, 0
  %v687 = vsel %vm559, 1, 0
  %v688 = vsel %vm560, 1, 0
  %v689 = vsel %vm561, 1, 0
  %v690 = vsel %vm562, 1, 0
  %v691 = vsel %vm563, 1, 0
  %v692 = vsel %vm564, 1, 0
  %v693 = vsel %vm565, 1, 0
  %v694 = vsel %vm566, 1, 0
  %v695 = vsel %vm567, 1, 0
  %v696 = vsel %vm568, 1, 0
  %v697 = vsel %vm569, 1, 0
  %v698 = vsel %vm570, 1, 0
  %v699 = vsel %vm571, 1, 0
  %v700 = vsel %vm572, 1, 0
  %v701 = vsel %vm573, 1, 0
  %v702 = vsel %vm574, 1, 0
  %v703 = vsel %vm575, 1, 0
  %v704 = vsel %vm576, 1, 0
  %v705 = vsel %vm577, 1, 0
  %v706 = vsel %vm578, 1, 0
  %v707 = vsel %vm579, 1, 0
  %v708 = vsel %vm580, 1, 0
  %v709 = vsel %vm581, 1, 0
  %v710 = vsel %vm582, 1, 0
  %v711 = vsel %vm583, 1, 0
  %v712 = vsel %vm584, 1, 0
  %v713 = vsel %vm585, 1, 0
  %v714 = vsel %vm586, 1, 0
  %v715 = vsel %vm587, 1, 0
  %v716 = vsel %vm588, 1, 0
  %v717 = vsel %vm589, 1, 0
  %v718 = vsel %vm590, 1, 0
  %v719 = vsel %vm591, 1, 0
  %v720 = vsel %vm592, 1, 0
  %v721 = vsel %vm593, 1, 0
  %v722 = vsel %vm594, 1, 0
  %v723 = vsel %vm595, 1, 0
  %v724 = vsel %vm596, 1, 0
  %v725 = vsel %vm597, 1, 0
  %v726 = vsel %vm598, 1, 0
  %v727 = vsel %vm599, 1, 0
  %v728 = vsel %vm600, 1, 0
  %v729 = vsel %vm601, 1, 0
  %v730 = vsel %vm602, 1, 0
  %v731 = vsel %vm603, 1, 0
  %v732 = vsel %vm604, 1, 0
  %v733 = vsel %vm605, 1, 0
  %v734 = vsel %vm606, 1, 0
  %v735 = vsel %vm607, 1, 0
  %v736 = vsel %vm608, 1, 0
  %v737 = vsel %vm609, 1, 0
  %v738 = vsel %vm610, 1, 0
  %v739 = vsel %vm611, 1, 0
  %v740 = vsel %vm612, 1, 0
  %v741 = vsel %vm613, 1, 0
  %v742 = vsel %vm614, 1, 0
  %v743 = vsel %vm615, 1, 0
  %v744 = vsel %vm616, 1, 0
  %v745 = vsel %vm617, 1, 0
  %v746 = vsel %vm618, 1, 0
  %v747 = vsel %vm619, 1, 0
  %v748 = vsel %vm620, 1, 0
  %v749 = vsel %vm621, 1, 0
  %v750 = vsel %vm622, 1, 0
  %v751 = vsel %vm623, 1, 0
  %v752 = vsel %vm624, 1, 0
  %v753 = vsel %vm625, 1, 0
  %v754 = vsel %vm626, 1, 0
  %v755 = vsel %vm627, 1, 0
  %v756 = vsel %vm628, 1, 0
  %v757 = vsel %vm629, 1, 0
  %v758 = vsel %vm630, 1, 0
  %v759 = vsel %vm631, 1, 0
  %v760 = vsel %vm632, 1, 0
  %v761 = vsel %vm633, 1, 0
  %v762 = vsel %vm634, 1, 0
  %v763 = vsel %vm635, 1, 0
  %v764 = vsel %vm636, 1, 0
  %v765 = vsel %vm637, 1, 0
  %v766 = vsel %vm638, 1, 0
  %v767 = vsel %vm639, 1, 0
  %v768 = vsel %vm640, 1, 0
  %v769 = vsel %vm641, 1, 0
  %v770 = vsel %vm642, 1, 0
  %v771 = vsel %vm643, 1, 0
  %v772 = vsel %vm644, 1, 0
  %v773 = vsel %vm645, 1, 0
  %v774 = vsel %vm646, 1, 0
  %v775 = vsel %vm647, 1, 0
  %v776 = vsel %vm648, 1, 0
  %v777 = vsel %vm649, 1, 0
  %v778 = vsel %vm650, 1, 0
  %v779 = vsel %vm651, 1, 0
  %v780 = vsel %vm652, 1, 0
  %v781 = vcvt.s32.f32 %v653
  %v782 = vcvt.s32.f32 %v654
  %v783 = vcvt.s32.f32 %v655
  %v784 = vcvt.s32.f32 %v656
  %v785 = vcvt.s32.f32 %v657
  %v786 = vcvt.s32.f32 %v658
  %v787 = vcvt.s32.f32 %v659
  %v788 = vcvt.s32.f32 %v660
  %v789 = vcvt.s32.f32 %v661
  %v790 = vcvt.s32.f32 %v662
  %v791 = vcvt.s32.f32 %v663
  %v792 = vcvt.s32.f32 %v664
  %v793 = vcvt.s32.f32 %v665
  %v794 = vcvt.s32.f32 %v666
  %v795 = vcvt.s32.f32 %v667
  %v796 = vcvt.s32.f32 %v668
  %v797 = vcvt.s32.f32 %v669
  %v798 = vcvt.s32.f32 %v670
  %v799 = vcvt.s32.f32 %v671
  %v800 = vcvt.s32.f32 %v672
  %v801 = vcvt.s32.f32 %v673
  %v802 = vcvt.s32.f32 %v674
  %v803 = vcvt.s32.f32 %v675
  %v804 = vcvt.s32.f32 %v676
  %v805 = vcvt.s32.f32 %v677
  %v806 = vcvt.s32.f32 %v678
  %v807 = vcvt.s32.f32 %v679
  %v808 = vcvt.s32.f32 %v680
  %v809 = vcvt.s32.f32 %v681
  %v810 = vcvt.s32.f32 %v682
  %v811 = vcvt.s32.f32 %v683
  %v812 = vcvt.s32.f32 %v684
  %v813 = vcvt.s32.f32 %v685
  %v814 = vcvt.s32.f32 %v686
  %v815 = vcvt.s32.f32 %v687
  %v816 = vcvt.s32.f32 %v688
  %v817 = vcvt.s32.f32 %v689
  %v818 = vcvt.s32.f32 %v690
  %v819 = vcvt.s32.f32 %v691
  %v820 = vcvt.s32.f32 %v692
  %v821 = vcvt.s32.f32 %v693
  %v822 = vcvt.s32.f32 %v694
  %v823 = vcvt.s32.f32 %v695
  %v824 = vcvt.s32.f32 %v696
  %v825 = vcvt.s32.f32 %v697
  %v826 = vcvt.s32.f32 %v698
  %v827 = vcvt.s32.f32 %v699
  %v828 = vcvt.s32.f32 %v700
  %v829 = vcvt.s32.f32 %v701
  %v830 = vcvt.s32.f32 %v702
  %v831 = vcvt.s32.f32 %v703
  %v832 = vcvt.s32.f32 %v704
  %v833 = vcvt.s32.f32 %v705
  %v834 = vcvt.s32.f32 %v706
  %v835 = vcvt.s32.f32 %v707
  %v836 = vcvt.s32.f32 %v708
  %v837 = vcvt.s32.f32 %v709
  %v838 = vcvt.s32.f32 %v710
  %v839 = vcvt.s32.f32 %v711
  %v840 = vcvt.s32.f32 %v712
  %v841 = vcvt.s32.f32 %v713
  %v842 = vcvt.s32.f32 %v714
  %v843 = vcvt.s32.f32 %v715
  %v844 = vcvt.s32.f32 %v716
  %v845 = vcvt.s32.f32 %v717
  %v846 = vcvt.s32.f32 %v718
  %v847 = vcvt.s32.f32 %v719
  %v848 = vcvt.s32.f32 %v720
  %v849 = vcvt.s32.f32 %v721
  %v850 = vcvt.s32.f32 %v722
  %v851 = vcvt.s32.f32 %v723
  %v852 = vcvt.s32.f32 %v724
  %v853 = vcvt.s32.f32 %v725
  %v854 = vcvt.s32.f32 %v726
  %v855 = vcvt.s32.f32 %v727
  %v856 = vcvt.s32.f32 %v728
  %v857 = vcvt.s32.f32 %v729
  %v858 = vcvt.s32.f32 %v730
  %v859 = vcvt.s32.f32 %v731
  %v860 = vcvt.s32.f32 %v732
  %v861 = vcvt.s32.f32 %v733
  %v862 = vcvt.s32.f32 %v734
  %v863 = vcvt.s32.f32 %v735
  %v864 = vcvt.s32.f32 %v736
  %v865 = vcvt.s32.f32 %v737
  %v866 = vcvt.s32.f32 %v738
  %v867 = vcvt.s32.f32 %v739
  %v868 = vcvt.s32.f32 %v740
  %v869 = vcvt.s32.f32 %v741
  %v870 = vcvt.s32.f32 %v742
  %v871 = vcvt.s32.f32 %v743
  %v872 = vcvt.s32.f32 %v744
  %v873 = vcvt.s32.f32 %v745
  %v874 = vcvt.s32.f32 %v746
  %v875 = vcvt.s32.f32 %v747
  %v876 = vcvt.s32.f32 %v748
  %v877 = vcvt.s32.f32 %v749
  %v878 = vcvt.s32.f32 %v750
  %v879 = vcvt.s32.f32 %v751
  %v880 = vcvt.s32.f32 %v752
  %v881 = vcvt.s32.f32 %v753
  %v882 = vcvt.s32.f32 %v754
  %v883 = vcvt.s32.f32 %v755
  %v884 = vcvt.s32.f32 %v756
  %v885 = vcvt.s32.f32 %v757
  %v886 = vcvt.s32.f32 %v758
  %v887 = vcvt.s32.f32 %v759
  %v888 = vcvt.s32.f32 %v760
  %v889 = vcvt.s32.f32 %v761
  %v890 = vcvt.s32.f32 %v762
  %v891 = vcvt.s32.f32 %v763
  %v892 = vcvt.s32.f32 %v764
  %v893 = vcvt.s32.f32 %v765
  %v894 = vcvt.s32.f32 %v766
  %v895 = vcvt.s32.f32 %v767
  %v896 = vcvt.s32.f32 %v768
  %v897 = vcvt.s32.f32 %v769
  %v898 = vcvt.s32.f32 %v770
  %v899 = vcvt.s32.f32 %v771
  %v900 = vcvt.s32.f32 %v772
  %v901 = vcvt.s32.f32 %v773
  %v902 = vcvt.s32.f32 %v774
  %v903 = vcvt.s32.f32 %v775
  %v904 = vcvt.s32.f32 %v776
  %v905 = vcvt.s32.f32 %v777
  %v906 = vcvt.s32.f32 %v778
  %v907 = vcvt.s32.f32 %v779
  %v908 = vcvt.s32.f32 %v780
  %v909 = vld [vmem:[%s1] sm:$0xff]
  %v910 = vld [vmem:[%s1 + $0x8] sm:$0xff]
  %v911 = vld [vmem:[%s1 + $0x10] sm:$0xff]
  %v912 = vld [vmem:[%s1 + $0x18] sm:$0xff]
  %v913 = vld [vmem:[%s1 + $0x20] sm:$0xff]
  %v914 = vld [vmem:[%s1 + $0x28] sm:$0xff]
  %v915 = vld [vmem:[%s1 + $0x30] sm:$0xff]
  %v916 = vld [vmem:[%s1 + $0x38] sm:$0xff]
  %vm917 = vcmask 523264
  %v919 = vsel %vm917, %v781, 0
  %v922 = vsel %vm917, %v782, 0
  %v925 = vsel %vm917, %v783, 0
  %v928 = vsel %vm917, %v784, 0
  %v931 = vsel %vm917, %v785, 0
  %v934 = vsel %vm917, %v786, 0
  %v937 = vsel %vm917, %v787, 0
  %v940 = vsel %vm917, %v788, 0
  %v943 = vsel %vm917, %v789, 0
  %v946 = vsel %vm917, %v790, 0
  %v949 = vsel %vm917, %v791, 0
  %v952 = vsel %vm917, %v792, 0
  %v955 = vsel %vm917, %v793, 0
  %v958 = vsel %vm917, %v794, 0
  %v961 = vsel %vm917, %v795, 0
  %v964 = vsel %vm917, %v796, 0
  %v967 = vsel %vm917, %v797, 0
  %v970 = vsel %vm917, %v798, 0
  %v973 = vsel %vm917, %v799, 0
  %v976 = vsel %vm917, %v800, 0
  %v979 = vsel %vm917, %v801, 0
  %v982 = vsel %vm917, %v802, 0
  %v985 = vsel %vm917, %v803, 0
  %v988 = vsel %vm917, %v804, 0
  %v991 = vsel %vm917, %v805, 0
  %v994 = vsel %vm917, %v806, 0
  %v997 = vsel %vm917, %v807, 0
  %v1000 = vsel %vm917, %v808, 0
  %v1003 = vsel %vm917, %v809, 0
  %v1006 = vsel %vm917, %v810, 0
  %v1009 = vsel %vm917, %v811, 0
  %v1012 = vsel %vm917, %v812, 0
  %v1015 = vsel %vm917, %v813, 0
  %v1018 = vsel %vm917, %v814, 0
  %v1021 = vsel %vm917, %v815, 0
  %v1024 = vsel %vm917, %v816, 0
  %v1027 = vsel %vm917, %v817, 0
  %v1030 = vsel %vm917, %v818, 0
  %v1033 = vsel %vm917, %v819, 0
  %v1036 = vsel %vm917, %v820, 0
  %v1039 = vsel %vm917, %v821, 0
  %v1042 = vsel %vm917, %v822, 0
  %v1045 = vsel %vm917, %v823, 0
  %v1048 = vsel %vm917, %v824, 0
  %v1051 = vsel %vm917, %v825, 0
  %v1054 = vsel %vm917, %v826, 0
  %v1057 = vsel %vm917, %v827, 0
  %v1060 = vsel %vm917, %v828, 0
  %v1063 = vsel %vm917, %v829, 0
  %v1066 = vsel %vm917, %v830, 0
  %v1069 = vsel %vm917, %v831, 0
  %v1072 = vsel %vm917, %v832, 0
  %v1075 = vsel %vm917, %v833, 0
  %v1078 = vsel %vm917, %v834, 0
  %v1081 = vsel %vm917, %v835, 0
  %v1084 = vsel %vm917, %v836, 0
  %v1087 = vsel %vm917, %v837, 0
  %v1090 = vsel %vm917, %v838, 0
  %v1093 = vsel %vm917, %v839, 0
  %v1096 = vsel %vm917, %v840, 0
  %v1099 = vsel %vm917, %v841, 0
  %v1102 = vsel %vm917, %v842, 0
  %v1105 = vsel %vm917, %v843, 0
  %v1108 = vsel %vm917, %v844, 0
  %v1111 = vsel %vm917, %v845, 0
  %v1114 = vsel %vm917, %v846, 0
  %v1117 = vsel %vm917, %v847, 0
  %v1120 = vsel %vm917, %v848, 0
  %v1123 = vsel %vm917, %v849, 0
  %v1126 = vsel %vm917, %v850, 0
  %v1129 = vsel %vm917, %v851, 0
  %v1132 = vsel %vm917, %v852, 0
  %v1135 = vsel %vm917, %v853, 0
  %v1138 = vsel %vm917, %v854, 0
  %v1141 = vsel %vm917, %v855, 0
  %v1144 = vsel %vm917, %v856, 0
  %v1147 = vsel %vm917, %v857, 0
  %v1150 = vsel %vm917, %v858, 0
  %v1153 = vsel %vm917, %v859, 0
  %v1156 = vsel %vm917, %v860, 0
  %v1159 = vsel %vm917, %v861, 0
  %v1162 = vsel %vm917, %v862, 0
  %v1165 = vsel %vm917, %v863, 0
  %v1168 = vsel %vm917, %v864, 0
  %v1171 = vsel %vm917, %v865, 0
  %v1174 = vsel %vm917, %v866, 0
  %v1177 = vsel %vm917, %v867, 0
  %v1180 = vsel %vm917, %v868, 0
  %v1183 = vsel %vm917, %v869, 0
  %v1186 = vsel %vm917, %v870, 0
  %v1189 = vsel %vm917, %v871, 0
  %v1192 = vsel %vm917, %v872, 0
  %v1195 = vsel %vm917, %v873, 0
  %v1198 = vsel %vm917, %v874, 0
  %v1201 = vsel %vm917, %v875, 0
  %v1204 = vsel %vm917, %v876, 0
  %v1207 = vsel %vm917, %v877, 0
  %v1210 = vsel %vm917, %v878, 0
  %v1213 = vsel %vm917, %v879, 0
  %v1216 = vsel %vm917, %v880, 0
  %v1219 = vsel %vm917, %v881, 0
  %v1222 = vsel %vm917, %v882, 0
  %v1225 = vsel %vm917, %v883, 0
  %v1228 = vsel %vm917, %v884, 0
  %v1231 = vsel %vm917, %v885, 0
  %v1234 = vsel %vm917, %v886, 0
  %v1237 = vsel %vm917, %v887, 0
  %v1240 = vsel %vm917, %v888, 0
  %v1243 = vsel %vm917, %v889, 0
  %v1246 = vsel %vm917, %v890, 0
  %v1249 = vsel %vm917, %v891, 0
  %v1252 = vsel %vm917, %v892, 0
  %v1255 = vsel %vm917, %v893, 0
  %v1258 = vsel %vm917, %v894, 0
  %v1261 = vsel %vm917, %v895, 0
  %v1264 = vsel %vm917, %v896, 0
  %v1267 = vsel %vm917, %v897, 0
  %v1270 = vsel %vm917, %v898, 0
  %v1273 = vsel %vm917, %v899, 0
  %v1276 = vsel %vm917, %v900, 0
  %v1279 = vsel %vm917, %v901, 0
  %v1282 = vsel %vm917, %v902, 0
  %v1285 = vsel %vm917, %v903, 0
  %v1288 = vsel %vm917, %v904, 0
  %v1291 = vsel %vm917, %v905, 0
  %v1294 = vsel %vm917, %v906, 0
  %v1297 = vsel %vm917, %v907, 0
  %v1300 = vsel %vm917, %v908, 0
  %1302 = vmatprep.subr.mxu0 0.0
  %1303 = vmatpush1.msra.mxu0 %v909
  %1304 = vmatprep.subr.mxu0 0.0
  %1305 = vmatpush1.msra.mxu0 %v910
  %1306 = vmatprep.subr.mxu0 0.0
  %1307 = vmatpush1.msra.mxu0 %v911
  %1308 = vmatprep.subr.mxu0 0.0
  %1309 = vmatpush1.msra.mxu0 %v912
  %1310 = vmatprep.subr.mxu0 0.0
  %1311 = vmatpush1.msra.mxu0 %v913
  %1312 = vmatprep.subr.mxu0 0.0
  %1313 = vmatpush1.msra.mxu0 %v914
  %1314 = vmatprep.subr.mxu0 0.0
  %1315 = vmatpush1.msra.mxu0 %v915
  %1316 = vmatprep.subr.mxu0 0.0
  %1317 = vmatpush1.msra.mxu0 %v916
  %1318 = vmatprep.subr.mxu0 0.0
  %1319 = vmatpush1.msra.mxu0 0.0
  %1320 = vmatprep.subr.mxu0 0.0
  %1321 = vmatpush1.msra.mxu0 0.0
  %1322 = vmatprep.subr.mxu0 0.0
  %1323 = vmatpush1.msra.mxu0 0.0
  %1324 = vmatprep.subr.mxu0 0.0
  %1325 = vmatpush1.msra.mxu0 0.0
  %1326 = vmatprep.subr.mxu0 0.0
  %1327 = vmatpush1.msra.mxu0 0.0
  %1328 = vmatprep.subr.mxu0 0.0
  %1329 = vmatpush1.msra.mxu0 0.0
  %1330 = vmatprep.subr.mxu0 0.0
  %1331 = vmatpush1.msra.mxu0 0.0
  %1332 = vmatprep.subr.mxu0 0.0
  %1333 = vmatpush1.msra.mxu0 0.0
  %1334 = vmatprep.subr.mxu0 0.0
  %1335 = vmatpush1.msra.mxu0 0.0
  %1336 = vmatprep.subr.mxu0 0.0
  %1337 = vmatpush1.msra.mxu0 0.0
  %1338 = vmatprep.subr.mxu0 0.0
  %1339 = vmatpush1.msra.mxu0 0.0
  %1340 = vmatprep.subr.mxu0 0.0
  %1341 = vmatpush1.msra.mxu0 0.0
  %1342 = vmatprep.subr.mxu0 0.0
  %1343 = vmatpush1.msra.mxu0 0.0
  %1344 = vmatprep.subr.mxu0 0.0
  %1345 = vmatpush1.msra.mxu0 0.0
  %1346 = vmatprep.subr.mxu0 0.0
  %1347 = vmatpush1.msra.mxu0 0.0
  %1348 = vmatprep.subr.mxu0 0.0
  %1349 = vmatpush1.msra.mxu0 0.0
  %1350 = vmatprep.subr.mxu0 0.0
  %1351 = vmatpush1.msra.mxu0 0.0
  %1352 = vmatprep.subr.mxu0 0.0
  %1353 = vmatpush1.msra.mxu0 0.0
  %1354 = vmatprep.subr.mxu0 0.0
  %1355 = vmatpush1.msra.mxu0 0.0
  %1356 = vmatprep.subr.mxu0 0.0
  %1357 = vmatpush1.msra.mxu0 0.0
  %1358 = vmatprep.subr.mxu0 0.0
  %1359 = vmatpush1.msra.mxu0 0.0
  %1360 = vmatprep.subr.mxu0 0.0
  %1361 = vmatpush1.msra.mxu0 0.0
  %1362 = vmatprep.subr.mxu0 0.0
  %1363 = vmatpush1.msra.mxu0 0.0
  %1364 = vmatprep.subr.mxu0 0.0
  %1365 = vmatpush1.msra.mxu0 0.0
  %1366 = vmatprep.mubr.f32.mxu0 0.0
  %1367 = vmatmul.mubr.f32.gmra.mrb[0].mxu0 %v919
  %v1368 = vpop.f32.mrb[0].mxu0
  %v1369 = vadd.f32 0.0, %v1368
  %v1370 = vpop.f32.mrb[0].mxu0
  %1371 = vmatprep.mubr.f32.mxu0 0.0
  %1372 = vmatmul.mubr.f32.gmra.mrb[0].mxu0 %v922
  %v1373 = vpop.f32.mrb[0].mxu0
  %v1374 = vadd.f32 0.0, %v1373
  %v1375 = vpop.f32.mrb[0].mxu0
  %1376 = vmatprep.mubr.f32.mxu0 0.0
  %1377 = vmatmul.mubr.f32.gmra.mrb[0].mxu0 %v925
  %v1378 = vpop.f32.mrb[0].mxu0
  %v1379 = vadd.f32 0.0, %v1378
  %v1380 = vpop.f32.mrb[0].mxu0
  %1381 = vmatprep.mubr.f32.mxu0 0.0
  %1382 = vmatmul.mubr.f32.gmra.mrb[0].mxu0 %v928
  %v1383 = vpop.f32.mrb[0].mxu0
  %v1384 = vadd.f32 0.0, %v1383
  %v1385 = vpop.f32.mrb[0].mxu0
  %1386 = vmatprep.mubr.f32.mxu0 0.0
  %1387 = vmatmul.mubr.f32.gmra.mrb[0].mxu0 %v931
  %v1388 = vpop.f32.mrb[0].mxu0
  %v1389 = vadd.f32 0.0, %v1388
  %v1390 = vpop.f32.mrb[0].mxu0
  %1391 = vmatprep.mubr.f32.mxu0 0.0
  %1392 = vmatmul.mubr.f32.gmra.mrb[0].mxu0 %v934
  %v1393 = vpop.f32.mrb[0].mxu0
  %v1394 = vadd.f32 0.0, %v1393
  %v1395 = vpop.f32.mrb[0].mxu0
  %1396 = vmatprep.mubr.f32.mxu0 0.0
  %1397 = vmatmul.mubr.f32.gmra.mrb[0].mxu0 %v937
  %v1398 = vpop.f32.mrb[0].mxu0
  %v1399 = vadd.f32 0.0, %v1398
  %v1400 = vpop.f32.mrb[0].mxu0
  %1401 = vmatprep.mubr.f32.mxu0 0.0
  %1402 = vmatmul.mubr.f32.gmra.mrb[0].mxu0 %v940
  %v1403 = vpop.f32.mrb[0].mxu0
  %v1404 = vadd.f32 0.0, %v1403
  %v1405 = vpop.f32.mrb[0].mxu0
  %1406 = vmatprep.mubr.f32.mxu0 0.0
  %1407 = vmatmul.mubr.f32.gmra.mrb[0].mxu0 %v943
  %v1408 = vpop.f32.mrb[0].mxu0
  %v1409 = vadd.f32 0.0, %v1408
  %v1410 = vpop.f32.mrb[0].mxu0
  %1411 = vmatprep.mubr.f32.mxu0 0.0
  %1412 = vmatmul.mubr.f32.gmra.mrb[0].mxu0 %v946
  %v1413 = vpop.f32.mrb[0].mxu0
  %v1414 = vadd.f32 0.0, %v1413
  %v1415 = vpop.f32.mrb[0].mxu0
  %1416 = vmatprep.mubr.f32.mxu0 0.0
  %1417 = vmatmul.mubr.f32.gmra.mrb[0].mxu0 %v949
  %v1418 = vpop.f32.mrb[0].mxu0
  %v1419 = vadd.f32 0.0, %v1418
  %v1420 = vpop.f32.mrb[0].mxu0
  %1421 = vmatprep.mubr.f32.mxu0 0.0
  %1422 = vmatmul.mubr.f32.gmra.mrb[0].mxu0 %v952
  %v1423 = vpop.f32.mrb[0].mxu0
  %v1424 = vadd.f32 0.0, %v1423
  %v1425 = vpop.f32.mrb[0].mxu0
  %1426 = vmatprep.mubr.f32.mxu0 0.0
  %1427 = vmatmul.mubr.f32.gmra.mrb[0].mxu0 %v955
  %v1428 = vpop.f32.mrb[0].mxu0
  %v1429 = vadd.f32 0.0, %v1428
  %v1430 = vpop.f32.mrb[0].mxu0
  %1431 = vmatprep.mubr.f32.mxu0 0.0
  %1432 = vmatmul.mubr.f32.gmra.mrb[0].mxu0 %v958
  %v1433 = vpop.f32.mrb[0].mxu0
  %v1434 = vadd.f32 0.0, %v1433
  %v1435 = vpop.f32.mrb[0].mxu0
  %1436 = vmatprep.mubr.f32.mxu0 0.0
  %1437 = vmatmul.mubr.f32.gmra.mrb[0].mxu0 %v961
  %v1438 = vpop.f32.mrb[0].mxu0
  %v1439 = vadd.f32 0.0, %v1438
  %v1440 = vpop.f32.mrb[0].mxu0
  %1441 = vmatprep.mubr.f32.mxu0 0.0
  %1442 = vmatmul.mubr.f32.gmra.mrb[0].mxu0 %v964
  %v1443 = vpop.f32.mrb[0].mxu0
  %v1444 = vadd.f32 0.0, %v1443
  %v1445 = vpop.f32.mrb[0].mxu0
  %1446 = vmatprep.mubr.f32.mxu0 0.0
  %1447 = vmatmul.mubr.f32.gmra.mrb[0].mxu0 %v967
  %v1448 = vpop.f32.mrb[0].mxu0
  %v1449 = vadd.f32 0.0, %v1448
  %v1450 = vpop.f32.mrb[0].mxu0
  %1451 = vmatprep.mubr.f32.mxu0 0.0
  %1452 = vmatmul.mubr.f32.gmra.mrb[0].mxu0 %v970
  %v1453 = vpop.f32.mrb[0].mxu0
  %v1454 = vadd.f32 0.0, %v1453
  %v1455 = vpop.f32.mrb[0].mxu0
  %1456 = vmatprep.mubr.f32.mxu0 0.0
  %1457 = vmatmul.mubr.f32.gmra.mrb[0].mxu0 %v973
  %v1458 = vpop.f32.mrb[0].mxu0
  %v1459 = vadd.f32 0.0, %v1458
  %v1460 = vpop.f32.mrb[0].mxu0
  %1461 = vmatprep.mubr.f32.mxu0 0.0
  %1462 = vmatmul.mubr.f32.gmra.mrb[0].mxu0 %v976
  %v1463 = vpop.f32.mrb[0].mxu0
  %v1464 = vadd.f32 0.0, %v1463
  %v1465 = vpop.f32.mrb[0].mxu0
  %1466 = vmatprep.mubr.f32.mxu0 0.0
  %1467 = vmatmul.mubr.f32.gmra.mrb[0].mxu0 %v979
  %v1468 = vpop.f32.mrb[0].mxu0
  %v1469 = vadd.f32 0.0, %v1468
  %v1470 = vpop.f32.mrb[0].mxu0
  %1471 = vmatprep.mubr.f32.mxu0 0.0
  %1472 = vmatmul.mubr.f32.gmra.mrb[0].mxu0 %v982
  %v1473 = vpop.f32.mrb[0].mxu0
  %v1474 = vadd.f32 0.0, %v1473
  %v1475 = vpop.f32.mrb[0].mxu0
  %1476 = vmatprep.mubr.f32.mxu0 0.0
  %1477 = vmatmul.mubr.f32.gmra.mrb[0].mxu0 %v985
  %v1478 = vpop.f32.mrb[0].mxu0
  %v1479 = vadd.f32 0.0, %v1478
  %v1480 = vpop.f32.mrb[0].mxu0
  %1481 = vmatprep.mubr.f32.mxu0 0.0
  %1482 = vmatmul.mubr.f32.gmra.mrb[0].mxu0 %v988
  %v1483 = vpop.f32.mrb[0].mxu0
  %v1484 = vadd.f32 0.0, %v1483
  %v1485 = vpop.f32.mrb[0].mxu0
  %1486 = vmatprep.mubr.f32.mxu0 0.0
  %1487 = vmatmul.mubr.f32.gmra.mrb[0].mxu0 %v991
  %v1488 = vpop.f32.mrb[0].mxu0
  %v1489 = vadd.f32 0.0, %v1488
  %v1490 = vpop.f32.mrb[0].mxu0
  %1491 = vmatprep.mubr.f32.mxu0 0.0
  %1492 = vmatmul.mubr.f32.gmra.mrb[0].mxu0 %v994
  %v1493 = vpop.f32.mrb[0].mxu0
  %v1494 = vadd.f32 0.0, %v1493
  %v1495 = vpop.f32.mrb[0].mxu0
  %1496 = vmatprep.mubr.f32.mxu0 0.0
  %1497 = vmatmul.mubr.f32.gmra.mrb[0].mxu0 %v997
  %v1498 = vpop.f32.mrb[0].mxu0
  %v1499 = vadd.f32 0.0, %v1498
  %v1500 = vpop.f32.mrb[0].mxu0
  %1501 = vmatprep.mubr.f32.mxu0 0.0
  %1502 = vmatmul.mubr.f32.gmra.mrb[0].mxu0 %v1000
  %v1503 = vpop.f32.mrb[0].mxu0
  %v1504 = vadd.f32 0.0, %v1503
  %v1505 = vpop.f32.mrb[0].mxu0
  %1506 = vmatprep.mubr.f32.mxu0 0.0
  %1507 = vmatmul.mubr.f32.gmra.mrb[0].mxu0 %v1003
  %v1508 = vpop.f32.mrb[0].mxu0
  %v1509 = vadd.f32 0.0, %v1508
  %v1510 = vpop.f32.mrb[0].mxu0
  %1511 = vmatprep.mubr.f32.mxu0 0.0
  %1512 = vmatmul.mubr.f32.gmra.mrb[0].mxu0 %v1006
  %v1513 = vpop.f32.mrb[0].mxu0
  %v1514 = vadd.f32 0.0, %v1513
  %v1515 = vpop.f32.mrb[0].mxu0
  %1516 = vmatprep.mubr.f32.mxu0 0.0
  %1517 = vmatmul.mubr.f32.gmra.mrb[0].mxu0 %v1009
  %v1518 = vpop.f32.mrb[0].mxu0
  %v1519 = vadd.f32 0.0, %v1518
  %v1520 = vpop.f32.mrb[0].mxu0
  %1521 = vmatprep.mubr.f32.mxu0 0.0
  %1522 = vmatmul.mubr.f32.gmra.mrb[0].mxu0 %v1012
  %v1523 = vpop.f32.mrb[0].mxu0
  %v1524 = vadd.f32 0.0, %v1523
  %v1525 = vpop.f32.mrb[0].mxu0
  %1526 = vmatprep.mubr.f32.mxu0 0.0
  %1527 = vmatmul.mubr.f32.gmra.mrb[0].mxu0 %v1015
  %v1528 = vpop.f32.mrb[0].mxu0
  %v1529 = vadd.f32 0.0, %v1528
  %v1530 = vpop.f32.mrb[0].mxu0
  %1531 = vmatprep.mubr.f32.mxu0 0.0
  %1532 = vmatmul.mubr.f32.gmra.mrb[0].mxu0 %v1018
  %v1533 = vpop.f32.mrb[0].mxu0
  %v1534 = vadd.f32 0.0, %v1533
  %v1535 = vpop.f32.mrb[0].mxu0
  %1536 = vmatprep.mubr.f32.mxu0 0.0
  %1537 = vmatmul.mubr.f32.gmra.mrb[0].mxu0 %v1021
  %v1538 = vpop.f32.mrb[0].mxu0
  %v1539 = vadd.f32 0.0, %v1538
  %v1540 = vpop.f32.mrb[0].mxu0
  %1541 = vmatprep.mubr.f32.mxu0 0.0
  %1542 = vmatmul.mubr.f32.gmra.mrb[0].mxu0 %v1024
  %v1543 = vpop.f32.mrb[0].mxu0
  %v1544 = vadd.f32 0.0, %v1543
  %v1545 = vpop.f32.mrb[0].mxu0
  %1546 = vmatprep.mubr.f32.mxu0 0.0
  %1547 = vmatmul.mubr.f32.gmra.mrb[0].mxu0 %v1027
  %v1548 = vpop.f32.mrb[0].mxu0
  %v1549 = vadd.f32 0.0, %v1548
  %v1550 = vpop.f32.mrb[0].mxu0
  %1551 = vmatprep.mubr.f32.mxu0 0.0
  %1552 = vmatmul.mubr.f32.gmra.mrb[0].mxu0 %v1030
  %v1553 = vpop.f32.mrb[0].mxu0
  %v1554 = vadd.f32 0.0, %v1553
  %v1555 = vpop.f32.mrb[0].mxu0
  %1556 = vmatprep.mubr.f32.mxu0 0.0
  %1557 = vmatmul.mubr.f32.gmra.mrb[0].mxu0 %v1033
  %v1558 = vpop.f32.mrb[0].mxu0
  %v1559 = vadd.f32 0.0, %v1558
  %v1560 = vpop.f32.mrb[0].mxu0
  %1561 = vmatprep.mubr.f32.mxu0 0.0
  %1562 = vmatmul.mubr.f32.gmra.mrb[0].mxu0 %v1036
  %v1563 = vpop.f32.mrb[0].mxu0
  %v1564 = vadd.f32 0.0, %v1563
  %v1565 = vpop.f32.mrb[0].mxu0
  %1566 = vmatprep.mubr.f32.mxu0 0.0
  %1567 = vmatmul.mubr.f32.gmra.mrb[0].mxu0 %v1039
  %v1568 = vpop.f32.mrb[0].mxu0
  %v1569 = vadd.f32 0.0, %v1568
  %v1570 = vpop.f32.mrb[0].mxu0
  %1571 = vmatprep.mubr.f32.mxu0 0.0
  %1572 = vmatmul.mubr.f32.gmra.mrb[0].mxu0 %v1042
  %v1573 = vpop.f32.mrb[0].mxu0
  %v1574 = vadd.f32 0.0, %v1573
  %v1575 = vpop.f32.mrb[0].mxu0
  %1576 = vmatprep.mubr.f32.mxu0 0.0
  %1577 = vmatmul.mubr.f32.gmra.mrb[0].mxu0 %v1045
  %v1578 = vpop.f32.mrb[0].mxu0
  %v1579 = vadd.f32 0.0, %v1578
  %v1580 = vpop.f32.mrb[0].mxu0
  %1581 = vmatprep.mubr.f32.mxu0 0.0
  %1582 = vmatmul.mubr.f32.gmra.mrb[0].mxu0 %v1048
  %v1583 = vpop.f32.mrb[0].mxu0
  %v1584 = vadd.f32 0.0, %v1583
  %v1585 = vpop.f32.mrb[0].mxu0
  %1586 = vmatprep.mubr.f32.mxu0 0.0
  %1587 = vmatmul.mubr.f32.gmra.mrb[0].mxu0 %v1051
  %v1588 = vpop.f32.mrb[0].mxu0
  %v1589 = vadd.f32 0.0, %v1588
  %v1590 = vpop.f32.mrb[0].mxu0
  %1591 = vmatprep.mubr.f32.mxu0 0.0
  %1592 = vmatmul.mubr.f32.gmra.mrb[0].mxu0 %v1054
  %v1593 = vpop.f32.mrb[0].mxu0
  %v1594 = vadd.f32 0.0, %v1593
  %v1595 = vpop.f32.mrb[0].mxu0
  %1596 = vmatprep.mubr.f32.mxu0 0.0
  %1597 = vmatmul.mubr.f32.gmra.mrb[0].mxu0 %v1057
  %v1598 = vpop.f32.mrb[0].mxu0
  %v1599 = vadd.f32 0.0, %v1598
  %v1600 = vpop.f32.mrb[0].mxu0
  %1601 = vmatprep.mubr.f32.mxu0 0.0
  %1602 = vmatmul.mubr.f32.gmra.mrb[0].mxu0 %v1060
  %v1603 = vpop.f32.mrb[0].mxu0
  %v1604 = vadd.f32 0.0, %v1603
  %v1605 = vpop.f32.mrb[0].mxu0
  %1606 = vmatprep.mubr.f32.mxu0 0.0
  %1607 = vmatmul.mubr.f32.gmra.mrb[0].mxu0 %v1063
  %v1608 = vpop.f32.mrb[0].mxu0
  %v1609 = vadd.f32 0.0, %v1608
  %v1610 = vpop.f32.mrb[0].mxu0
  %1611 = vmatprep.mubr.f32.mxu0 0.0
  %1612 = vmatmul.mubr.f32.gmra.mrb[0].mxu0 %v1066
  %v1613 = vpop.f32.mrb[0].mxu0
  %v1614 = vadd.f32 0.0, %v1613
  %v1615 = vpop.f32.mrb[0].mxu0
  %1616 = vmatprep.mubr.f32.mxu0 0.0
  %1617 = vmatmul.mubr.f32.gmra.mrb[0].mxu0 %v1069
  %v1618 = vpop.f32.mrb[0].mxu0
  %v1619 = vadd.f32 0.0, %v1618
  %v1620 = vpop.f32.mrb[0].mxu0
  %1621 = vmatprep.mubr.f32.mxu0 0.0
  %1622 = vmatmul.mubr.f32.gmra.mrb[0].mxu0 %v1072
  %v1623 = vpop.f32.mrb[0].mxu0
  %v1624 = vadd.f32 0.0, %v1623
  %v1625 = vpop.f32.mrb[0].mxu0
  %1626 = vmatprep.mubr.f32.mxu0 0.0
  %1627 = vmatmul.mubr.f32.gmra.mrb[0].mxu0 %v1075
  %v1628 = vpop.f32.mrb[0].mxu0
  %v1629 = vadd.f32 0.0, %v1628
  %v1630 = vpop.f32.mrb[0].mxu0
  %1631 = vmatprep.mubr.f32.mxu0 0.0
  %1632 = vmatmul.mubr.f32.gmra.mrb[0].mxu0 %v1078
  %v1633 = vpop.f32.mrb[0].mxu0
  %v1634 = vadd.f32 0.0, %v1633
  %v1635 = vpop.f32.mrb[0].mxu0
  %1636 = vmatprep.mubr.f32.mxu0 0.0
  %1637 = vmatmul.mubr.f32.gmra.mrb[0].mxu0 %v1081
  %v1638 = vpop.f32.mrb[0].mxu0
  %v1639 = vadd.f32 0.0, %v1638
  %v1640 = vpop.f32.mrb[0].mxu0
  %1641 = vmatprep.mubr.f32.mxu0 0.0
  %1642 = vmatmul.mubr.f32.gmra.mrb[0].mxu0 %v1084
  %v1643 = vpop.f32.mrb[0].mxu0
  %v1644 = vadd.f32 0.0, %v1643
  %v1645 = vpop.f32.mrb[0].mxu0
  %1646 = vmatprep.mubr.f32.mxu0 0.0
  %1647 = vmatmul.mubr.f32.gmra.mrb[0].mxu0 %v1087
  %v1648 = vpop.f32.mrb[0].mxu0
  %v1649 = vadd.f32 0.0, %v1648
  %v1650 = vpop.f32.mrb[0].mxu0
  %1651 = vmatprep.mubr.f32.mxu0 0.0
  %1652 = vmatmul.mubr.f32.gmra.mrb[0].mxu0 %v1090
  %v1653 = vpop.f32.mrb[0].mxu0
  %v1654 = vadd.f32 0.0, %v1653
  %v1655 = vpop.f32.mrb[0].mxu0
  %1656 = vmatprep.mubr.f32.mxu0 0.0
  %1657 = vmatmul.mubr.f32.gmra.mrb[0].mxu0 %v1093
  %v1658 = vpop.f32.mrb[0].mxu0
  %v1659 = vadd.f32 0.0, %v1658
  %v1660 = vpop.f32.mrb[0].mxu0
  %1661 = vmatprep.mubr.f32.mxu0 0.0
  %1662 = vmatmul.mubr.f32.gmra.mrb[0].mxu0 %v1096
  %v1663 = vpop.f32.mrb[0].mxu0
  %v1664 = vadd.f32 0.0, %v1663
  %v1665 = vpop.f32.mrb[0].mxu0
  %1666 = vmatprep.mubr.f32.mxu0 0.0
  %1667 = vmatmul.mubr.f32.gmra.mrb[0].mxu0 %v1099
  %v1668 = vpop.f32.mrb[0].mxu0
  %v1669 = vadd.f32 0.0, %v1668
  %v1670 = vpop.f32.mrb[0].mxu0
  %1671 = vmatprep.mubr.f32.mxu0 0.0
  %1672 = vmatmul.mubr.f32.gmra.mrb[0].mxu0 %v1102
  %v1673 = vpop.f32.mrb[0].mxu0
  %v1674 = vadd.f32 0.0, %v1673
  %v1675 = vpop.f32.mrb[0].mxu0
  %1676 = vmatprep.mubr.f32.mxu0 0.0
  %1677 = vmatmul.mubr.f32.gmra.mrb[0].mxu0 %v1105
  %v1678 = vpop.f32.mrb[0].mxu0
  %v1679 = vadd.f32 0.0, %v1678
  %v1680 = vpop.f32.mrb[0].mxu0
  %1681 = vmatprep.mubr.f32.mxu0 0.0
  %1682 = vmatmul.mubr.f32.gmra.mrb[0].mxu0 %v1108
  %v1683 = vpop.f32.mrb[0].mxu0
  %v1684 = vadd.f32 0.0, %v1683
  %v1685 = vpop.f32.mrb[0].mxu0
  %1686 = vmatprep.mubr.f32.mxu0 0.0
  %1687 = vmatmul.mubr.f32.gmra.mrb[0].mxu0 %v1111
  %v1688 = vpop.f32.mrb[0].mxu0
  %v1689 = vadd.f32 0.0, %v1688
  %v1690 = vpop.f32.mrb[0].mxu0
  %1691 = vmatprep.mubr.f32.mxu0 0.0
  %1692 = vmatmul.mubr.f32.gmra.mrb[0].mxu0 %v1114
  %v1693 = vpop.f32.mrb[0].mxu0
  %v1694 = vadd.f32 0.0, %v1693
  %v1695 = vpop.f32.mrb[0].mxu0
  %1696 = vmatprep.mubr.f32.mxu0 0.0
  %1697 = vmatmul.mubr.f32.gmra.mrb[0].mxu0 %v1117
  %v1698 = vpop.f32.mrb[0].mxu0
  %v1699 = vadd.f32 0.0, %v1698
  %v1700 = vpop.f32.mrb[0].mxu0
  %1701 = vmatprep.mubr.f32.mxu0 0.0
  %1702 = vmatmul.mubr.f32.gmra.mrb[0].mxu0 %v1120
  %v1703 = vpop.f32.mrb[0].mxu0
  %v1704 = vadd.f32 0.0, %v1703
  %v1705 = vpop.f32.mrb[0].mxu0
  %1706 = vmatprep.mubr.f32.mxu0 0.0
  %1707 = vmatmul.mubr.f32.gmra.mrb[0].mxu0 %v1123
  %v1708 = vpop.f32.mrb[0].mxu0
  %v1709 = vadd.f32 0.0, %v1708
  %v1710 = vpop.f32.mrb[0].mxu0
  %1711 = vmatprep.mubr.f32.mxu0 0.0
  %1712 = vmatmul.mubr.f32.gmra.mrb[0].mxu0 %v1126
  %v1713 = vpop.f32.mrb[0].mxu0
  %v1714 = vadd.f32 0.0, %v1713
  %v1715 = vpop.f32.mrb[0].mxu0
  %1716 = vmatprep.mubr.f32.mxu0 0.0
  %1717 = vmatmul.mubr.f32.gmra.mrb[0].mxu0 %v1129
  %v1718 = vpop.f32.mrb[0].mxu0
  %v1719 = vadd.f32 0.0, %v1718
  %v1720 = vpop.f32.mrb[0].mxu0
  %1721 = vmatprep.mubr.f32.mxu0 0.0
  %1722 = vmatmul.mubr.f32.gmra.mrb[0].mxu0 %v1132
  %v1723 = vpop.f32.mrb[0].mxu0
  %v1724 = vadd.f32 0.0, %v1723
  %v1725 = vpop.f32.mrb[0].mxu0
  %1726 = vmatprep.mubr.f32.mxu0 0.0
  %1727 = vmatmul.mubr.f32.gmra.mrb[0].mxu0 %v1135
  %v1728 = vpop.f32.mrb[0].mxu0
  %v1729 = vadd.f32 0.0, %v1728
  %v1730 = vpop.f32.mrb[0].mxu0
  %1731 = vmatprep.mubr.f32.mxu0 0.0
  %1732 = vmatmul.mubr.f32.gmra.mrb[0].mxu0 %v1138
  %v1733 = vpop.f32.mrb[0].mxu0
  %v1734 = vadd.f32 0.0, %v1733
  %v1735 = vpop.f32.mrb[0].mxu0
  %1736 = vmatprep.mubr.f32.mxu0 0.0
  %1737 = vmatmul.mubr.f32.gmra.mrb[0].mxu0 %v1141
  %v1738 = vpop.f32.mrb[0].mxu0
  %v1739 = vadd.f32 0.0, %v1738
  %v1740 = vpop.f32.mrb[0].mxu0
  %1741 = vmatprep.mubr.f32.mxu0 0.0
  %1742 = vmatmul.mubr.f32.gmra.mrb[0].mxu0 %v1144
  %v1743 = vpop.f32.mrb[0].mxu0
  %v1744 = vadd.f32 0.0, %v1743
  %v1745 = vpop.f32.mrb[0].mxu0
  %1746 = vmatprep.mubr.f32.mxu0 0.0
  %1747 = vmatmul.mubr.f32.gmra.mrb[0].mxu0 %v1147
  %v1748 = vpop.f32.mrb[0].mxu0
  %v1749 = vadd.f32 0.0, %v1748
  %v1750 = vpop.f32.mrb[0].mxu0
  %1751 = vmatprep.mubr.f32.mxu0 0.0
  %1752 = vmatmul.mubr.f32.gmra.mrb[0].mxu0 %v1150
  %v1753 = vpop.f32.mrb[0].mxu0
  %v1754 = vadd.f32 0.0, %v1753
  %v1755 = vpop.f32.mrb[0].mxu0
  %1756 = vmatprep.mubr.f32.mxu0 0.0
  %1757 = vmatmul.mubr.f32.gmra.mrb[0].mxu0 %v1153
  %v1758 = vpop.f32.mrb[0].mxu0
  %v1759 = vadd.f32 0.0, %v1758
  %v1760 = vpop.f32.mrb[0].mxu0
  %1761 = vmatprep.mubr.f32.mxu0 0.0
  %1762 = vmatmul.mubr.f32.gmra.mrb[0].mxu0 %v1156
  %v1763 = vpop.f32.mrb[0].mxu0
  %v1764 = vadd.f32 0.0, %v1763
  %v1765 = vpop.f32.mrb[0].mxu0
  %1766 = vmatprep.mubr.f32.mxu0 0.0
  %1767 = vmatmul.mubr.f32.gmra.mrb[0].mxu0 %v1159
  %v1768 = vpop.f32.mrb[0].mxu0
  %v1769 = vadd.f32 0.0, %v1768
  %v1770 = vpop.f32.mrb[0].mxu0
  %1771 = vmatprep.mubr.f32.mxu0 0.0
  %1772 = vmatmul.mubr.f32.gmra.mrb[0].mxu0 %v1162
  %v1773 = vpop.f32.mrb[0].mxu0
  %v1774 = vadd.f32 0.0, %v1773
  %v1775 = vpop.f32.mrb[0].mxu0
  %1776 = vmatprep.mubr.f32.mxu0 0.0
  %1777 = vmatmul.mubr.f32.gmra.mrb[0].mxu0 %v1165
  %v1778 = vpop.f32.mrb[0].mxu0
  %v1779 = vadd.f32 0.0, %v1778
  %v1780 = vpop.f32.mrb[0].mxu0
  %1781 = vmatprep.mubr.f32.mxu0 0.0
  %1782 = vmatmul.mubr.f32.gmra.mrb[0].mxu0 %v1168
  %v1783 = vpop.f32.mrb[0].mxu0
  %v1784 = vadd.f32 0.0, %v1783
  %v1785 = vpop.f32.mrb[0].mxu0
  %1786 = vmatprep.mubr.f32.mxu0 0.0
  %1787 = vmatmul.mubr.f32.gmra.mrb[0].mxu0 %v1171
  %v1788 = vpop.f32.mrb[0].mxu0
  %v1789 = vadd.f32 0.0, %v1788
  %v1790 = vpop.f32.mrb[0].mxu0
  %1791 = vmatprep.mubr.f32.mxu0 0.0
  %1792 = vmatmul.mubr.f32.gmra.mrb[0].mxu0 %v1174
  %v1793 = vpop.f32.mrb[0].mxu0
  %v1794 = vadd.f32 0.0, %v1793
  %v1795 = vpop.f32.mrb[0].mxu0
  %1796 = vmatprep.mubr.f32.mxu0 0.0
  %1797 = vmatmul.mubr.f32.gmra.mrb[0].mxu0 %v1177
  %v1798 = vpop.f32.mrb[0].mxu0
  %v1799 = vadd.f32 0.0, %v1798
  %v1800 = vpop.f32.mrb[0].mxu0
  %1801 = vmatprep.mubr.f32.mxu0 0.0
  %1802 = vmatmul.mubr.f32.gmra.mrb[0].mxu0 %v1180
  %v1803 = vpop.f32.mrb[0].mxu0
  %v1804 = vadd.f32 0.0, %v1803
  %v1805 = vpop.f32.mrb[0].mxu0
  %1806 = vmatprep.mubr.f32.mxu0 0.0
  %1807 = vmatmul.mubr.f32.gmra.mrb[0].mxu0 %v1183
  %v1808 = vpop.f32.mrb[0].mxu0
  %v1809 = vadd.f32 0.0, %v1808
  %v1810 = vpop.f32.mrb[0].mxu0
  %1811 = vmatprep.mubr.f32.mxu0 0.0
  %1812 = vmatmul.mubr.f32.gmra.mrb[0].mxu0 %v1186
  %v1813 = vpop.f32.mrb[0].mxu0
  %v1814 = vadd.f32 0.0, %v1813
  %v1815 = vpop.f32.mrb[0].mxu0
  %1816 = vmatprep.mubr.f32.mxu0 0.0
  %1817 = vmatmul.mubr.f32.gmra.mrb[0].mxu0 %v1189
  %v1818 = vpop.f32.mrb[0].mxu0
  %v1819 = vadd.f32 0.0, %v1818
  %v1820 = vpop.f32.mrb[0].mxu0
  %1821 = vmatprep.mubr.f32.mxu0 0.0
  %1822 = vmatmul.mubr.f32.gmra.mrb[0].mxu0 %v1192
  %v1823 = vpop.f32.mrb[0].mxu0
  %v1824 = vadd.f32 0.0, %v1823
  %v1825 = vpop.f32.mrb[0].mxu0
  %1826 = vmatprep.mubr.f32.mxu0 0.0
  %1827 = vmatmul.mubr.f32.gmra.mrb[0].mxu0 %v1195
  %v1828 = vpop.f32.mrb[0].mxu0
  %v1829 = vadd.f32 0.0, %v1828
  %v1830 = vpop.f32.mrb[0].mxu0
  %1831 = vmatprep.mubr.f32.mxu0 0.0
  %1832 = vmatmul.mubr.f32.gmra.mrb[0].mxu0 %v1198
  %v1833 = vpop.f32.mrb[0].mxu0
  %v1834 = vadd.f32 0.0, %v1833
  %v1835 = vpop.f32.mrb[0].mxu0
  %1836 = vmatprep.mubr.f32.mxu0 0.0
  %1837 = vmatmul.mubr.f32.gmra.mrb[0].mxu0 %v1201
  %v1838 = vpop.f32.mrb[0].mxu0
  %v1839 = vadd.f32 0.0, %v1838
  %v1840 = vpop.f32.mrb[0].mxu0
  %1841 = vmatprep.mubr.f32.mxu0 0.0
  %1842 = vmatmul.mubr.f32.gmra.mrb[0].mxu0 %v1204
  %v1843 = vpop.f32.mrb[0].mxu0
  %v1844 = vadd.f32 0.0, %v1843
  %v1845 = vpop.f32.mrb[0].mxu0
  %1846 = vmatprep.mubr.f32.mxu0 0.0
  %1847 = vmatmul.mubr.f32.gmra.mrb[0].mxu0 %v1207
  %v1848 = vpop.f32.mrb[0].mxu0
  %v1849 = vadd.f32 0.0, %v1848
  %v1850 = vpop.f32.mrb[0].mxu0
  %1851 = vmatprep.mubr.f32.mxu0 0.0
  %1852 = vmatmul.mubr.f32.gmra.mrb[0].mxu0 %v1210
  %v1853 = vpop.f32.mrb[0].mxu0
  %v1854 = vadd.f32 0.0, %v1853
  %v1855 = vpop.f32.mrb[0].mxu0
  %1856 = vmatprep.mubr.f32.mxu0 0.0
  %1857 = vmatmul.mubr.f32.gmra.mrb[0].mxu0 %v1213
  %v1858 = vpop.f32.mrb[0].mxu0
  %v1859 = vadd.f32 0.0, %v1858
  %v1860 = vpop.f32.mrb[0].mxu0
  %1861 = vmatprep.mubr.f32.mxu0 0.0
  %1862 = vmatmul.mubr.f32.gmra.mrb[0].mxu0 %v1216
  %v1863 = vpop.f32.mrb[0].mxu0
  %v1864 = vadd.f32 0.0, %v1863
  %v1865 = vpop.f32.mrb[0].mxu0
  %1866 = vmatprep.mubr.f32.mxu0 0.0
  %1867 = vmatmul.mubr.f32.gmra.mrb[0].mxu0 %v1219
  %v1868 = vpop.f32.mrb[0].mxu0
  %v1869 = vadd.f32 0.0, %v1868
  %v1870 = vpop.f32.mrb[0].mxu0
  %1871 = vmatprep.mubr.f32.mxu0 0.0
  %1872 = vmatmul.mubr.f32.gmra.mrb[0].mxu0 %v1222
  %v1873 = vpop.f32.mrb[0].mxu0
  %v1874 = vadd.f32 0.0, %v1873
  %v1875 = vpop.f32.mrb[0].mxu0
  %1876 = vmatprep.mubr.f32.mxu0 0.0
  %1877 = vmatmul.mubr.f32.gmra.mrb[0].mxu0 %v1225
  %v1878 = vpop.f32.mrb[0].mxu0
  %v1879 = vadd.f32 0.0, %v1878
  %v1880 = vpop.f32.mrb[0].mxu0
  %1881 = vmatprep.mubr.f32.mxu0 0.0
  %1882 = vmatmul.mubr.f32.gmra.mrb[0].mxu0 %v1228
  %v1883 = vpop.f32.mrb[0].mxu0
  %v1884 = vadd.f32 0.0, %v1883
  %v1885 = vpop.f32.mrb[0].mxu0
  %1886 = vmatprep.mubr.f32.mxu0 0.0
  %1887 = vmatmul.mubr.f32.gmra.mrb[0].mxu0 %v1231
  %v1888 = vpop.f32.mrb[0].mxu0
  %v1889 = vadd.f32 0.0, %v1888
  %v1890 = vpop.f32.mrb[0].mxu0
  %1891 = vmatprep.mubr.f32.mxu0 0.0
  %1892 = vmatmul.mubr.f32.gmra.mrb[0].mxu0 %v1234
  %v1893 = vpop.f32.mrb[0].mxu0
  %v1894 = vadd.f32 0.0, %v1893
  %v1895 = vpop.f32.mrb[0].mxu0
  %1896 = vmatprep.mubr.f32.mxu0 0.0
  %1897 = vmatmul.mubr.f32.gmra.mrb[0].mxu0 %v1237
  %v1898 = vpop.f32.mrb[0].mxu0
  %v1899 = vadd.f32 0.0, %v1898
  %v1900 = vpop.f32.mrb[0].mxu0
  %1901 = vmatprep.mubr.f32.mxu0 0.0
  %1902 = vmatmul.mubr.f32.gmra.mrb[0].mxu0 %v1240
  %v1903 = vpop.f32.mrb[0].mxu0
  %v1904 = vadd.f32 0.0, %v1903
  %v1905 = vpop.f32.mrb[0].mxu0
  %1906 = vmatprep.mubr.f32.mxu0 0.0
  %1907 = vmatmul.mubr.f32.gmra.mrb[0].mxu0 %v1243
  %v1908 = vpop.f32.mrb[0].mxu0
  %v1909 = vadd.f32 0.0, %v1908
  %v1910 = vpop.f32.mrb[0].mxu0
  %1911 = vmatprep.mubr.f32.mxu0 0.0
  %1912 = vmatmul.mubr.f32.gmra.mrb[0].mxu0 %v1246
  %v1913 = vpop.f32.mrb[0].mxu0
  %v1914 = vadd.f32 0.0, %v1913
  %v1915 = vpop.f32.mrb[0].mxu0
  %1916 = vmatprep.mubr.f32.mxu0 0.0
  %1917 = vmatmul.mubr.f32.gmra.mrb[0].mxu0 %v1249
  %v1918 = vpop.f32.mrb[0].mxu0
  %v1919 = vadd.f32 0.0, %v1918
  %v1920 = vpop.f32.mrb[0].mxu0
  %1921 = vmatprep.mubr.f32.mxu0 0.0
  %1922 = vmatmul.mubr.f32.gmra.mrb[0].mxu0 %v1252
  %v1923 = vpop.f32.mrb[0].mxu0
  %v1924 = vadd.f32 0.0, %v1923
  %v1925 = vpop.f32.mrb[0].mxu0
  %1926 = vmatprep.mubr.f32.mxu0 0.0
  %1927 = vmatmul.mubr.f32.gmra.mrb[0].mxu0 %v1255
  %v1928 = vpop.f32.mrb[0].mxu0
  %v1929 = vadd.f32 0.0, %v1928
  %v1930 = vpop.f32.mrb[0].mxu0
  %1931 = vmatprep.mubr.f32.mxu0 0.0
  %1932 = vmatmul.mubr.f32.gmra.mrb[0].mxu0 %v1258
  %v1933 = vpop.f32.mrb[0].mxu0
  %v1934 = vadd.f32 0.0, %v1933
  %v1935 = vpop.f32.mrb[0].mxu0
  %1936 = vmatprep.mubr.f32.mxu0 0.0
  %1937 = vmatmul.mubr.f32.gmra.mrb[0].mxu0 %v1261
  %v1938 = vpop.f32.mrb[0].mxu0
  %v1939 = vadd.f32 0.0, %v1938
  %v1940 = vpop.f32.mrb[0].mxu0
  %1941 = vmatprep.mubr.f32.mxu0 0.0
  %1942 = vmatmul.mubr.f32.gmra.mrb[0].mxu0 %v1264
  %v1943 = vpop.f32.mrb[0].mxu0
  %v1944 = vadd.f32 0.0, %v1943
  %v1945 = vpop.f32.mrb[0].mxu0
  %1946 = vmatprep.mubr.f32.mxu0 0.0
  %1947 = vmatmul.mubr.f32.gmra.mrb[0].mxu0 %v1267
  %v1948 = vpop.f32.mrb[0].mxu0
  %v1949 = vadd.f32 0.0, %v1948
  %v1950 = vpop.f32.mrb[0].mxu0
  %1951 = vmatprep.mubr.f32.mxu0 0.0
  %1952 = vmatmul.mubr.f32.gmra.mrb[0].mxu0 %v1270
  %v1953 = vpop.f32.mrb[0].mxu0
  %v1954 = vadd.f32 0.0, %v1953
  %v1955 = vpop.f32.mrb[0].mxu0
  %1956 = vmatprep.mubr.f32.mxu0 0.0
  %1957 = vmatmul.mubr.f32.gmra.mrb[0].mxu0 %v1273
  %v1958 = vpop.f32.mrb[0].mxu0
  %v1959 = vadd.f32 0.0, %v1958
  %v1960 = vpop.f32.mrb[0].mxu0
  %1961 = vmatprep.mubr.f32.mxu0 0.0
  %1962 = vmatmul.mubr.f32.gmra.mrb[0].mxu0 %v1276
  %v1963 = vpop.f32.mrb[0].mxu0
  %v1964 = vadd.f32 0.0, %v1963
  %v1965 = vpop.f32.mrb[0].mxu0
  %1966 = vmatprep.mubr.f32.mxu0 0.0
  %1967 = vmatmul.mubr.f32.gmra.mrb[0].mxu0 %v1279
  %v1968 = vpop.f32.mrb[0].mxu0
  %v1969 = vadd.f32 0.0, %v1968
  %v1970 = vpop.f32.mrb[0].mxu0
  %1971 = vmatprep.mubr.f32.mxu0 0.0
  %1972 = vmatmul.mubr.f32.gmra.mrb[0].mxu0 %v1282
  %v1973 = vpop.f32.mrb[0].mxu0
  %v1974 = vadd.f32 0.0, %v1973
  %v1975 = vpop.f32.mrb[0].mxu0
  %1976 = vmatprep.mubr.f32.mxu0 0.0
  %1977 = vmatmul.mubr.f32.gmra.mrb[0].mxu0 %v1285
  %v1978 = vpop.f32.mrb[0].mxu0
  %v1979 = vadd.f32 0.0, %v1978
  %v1980 = vpop.f32.mrb[0].mxu0
  %1981 = vmatprep.mubr.f32.mxu0 0.0
  %1982 = vmatmul.mubr.f32.gmra.mrb[0].mxu0 %v1288
  %v1983 = vpop.f32.mrb[0].mxu0
  %v1984 = vadd.f32 0.0, %v1983
  %v1985 = vpop.f32.mrb[0].mxu0
  %1986 = vmatprep.mubr.f32.mxu0 0.0
  %1987 = vmatmul.mubr.f32.gmra.mrb[0].mxu0 %v1291
  %v1988 = vpop.f32.mrb[0].mxu0
  %v1989 = vadd.f32 0.0, %v1988
  %v1990 = vpop.f32.mrb[0].mxu0
  %1991 = vmatprep.mubr.f32.mxu0 0.0
  %1992 = vmatmul.mubr.f32.gmra.mrb[0].mxu0 %v1294
  %v1993 = vpop.f32.mrb[0].mxu0
  %v1994 = vadd.f32 0.0, %v1993
  %v1995 = vpop.f32.mrb[0].mxu0
  %1996 = vmatprep.mubr.f32.mxu0 0.0
  %1997 = vmatmul.mubr.f32.gmra.mrb[0].mxu0 %v1297
  %v1998 = vpop.f32.mrb[0].mxu0
  %v1999 = vadd.f32 0.0, %v1998
  %v2000 = vpop.f32.mrb[0].mxu0
  %2001 = vmatprep.mubr.f32.mxu0 0.0
  %2002 = vmatmul.mubr.f32.gmra.mrb[0].mxu0 %v1300
  %v2003 = vpop.f32.mrb[0].mxu0
  %v2004 = vadd.f32 0.0, %v2003
  %v2005 = vpop.f32.mrb[0].mxu0
  %2006 = vdwg.mxu0
  %vm2007 = vcmask 261120
  %2008 = vst.msk [vmem:[%s2] sm:$0xff] %vm2007, %v1369
  %2009 = vst.msk [vmem:[%s2 + $0x8] sm:$0xff] %vm2007, %v1374
  %2010 = vst.msk [vmem:[%s2 + $0x10] sm:$0xff] %vm2007, %v1379
  %2011 = vst.msk [vmem:[%s2 + $0x18] sm:$0xff] %vm2007, %v1384
  %2012 = vst.msk [vmem:[%s2 + $0x20] sm:$0xff] %vm2007, %v1389
  %2013 = vst.msk [vmem:[%s2 + $0x28] sm:$0xff] %vm2007, %v1394
  %2014 = vst.msk [vmem:[%s2 + $0x30] sm:$0xff] %vm2007, %v1399
  %2015 = vst.msk [vmem:[%s2 + $0x38] sm:$0xff] %vm2007, %v1404
  %2016 = vst.msk [vmem:[%s2 + $0x40] sm:$0xff] %vm2007, %v1409
  %2017 = vst.msk [vmem:[%s2 + $0x48] sm:$0xff] %vm2007, %v1414
  %2018 = vst.msk [vmem:[%s2 + $0x50] sm:$0xff] %vm2007, %v1419
  %2019 = vst.msk [vmem:[%s2 + $0x58] sm:$0xff] %vm2007, %v1424
  %2020 = vst.msk [vmem:[%s2 + $0x60] sm:$0xff] %vm2007, %v1429
  %2021 = vst.msk [vmem:[%s2 + $0x68] sm:$0xff] %vm2007, %v1434
  %2022 = vst.msk [vmem:[%s2 + $0x70] sm:$0xff] %vm2007, %v1439
  %2023 = vst.msk [vmem:[%s2 + $0x78] sm:$0xff] %vm2007, %v1444
  %2024 = vst.msk [vmem:[%s2 + $0x80] sm:$0xff] %vm2007, %v1449
  %2025 = vst.msk [vmem:[%s2 + $0x88] sm:$0xff] %vm2007, %v1454
  %2026 = vst.msk [vmem:[%s2 + $0x90] sm:$0xff] %vm2007, %v1459
  %2027 = vst.msk [vmem:[%s2 + $0x98] sm:$0xff] %vm2007, %v1464
  %2028 = vst.msk [vmem:[%s2 + $0xa0] sm:$0xff] %vm2007, %v1469
  %2029 = vst.msk [vmem:[%s2 + $0xa8] sm:$0xff] %vm2007, %v1474
  %2030 = vst.msk [vmem:[%s2 + $0xb0] sm:$0xff] %vm2007, %v1479
  %2031 = vst.msk [vmem:[%s2 + $0xb8] sm:$0xff] %vm2007, %v1484
  %2032 = vst.msk [vmem:[%s2 + $0xc0] sm:$0xff] %vm2007, %v1489
  %2033 = vst.msk [vmem:[%s2 + $0xc8] sm:$0xff] %vm2007, %v1494
  %2034 = vst.msk [vmem:[%s2 + $0xd0] sm:$0xff] %vm2007, %v1499
  %2035 = vst.msk [vmem:[%s2 + $0xd8] sm:$0xff] %vm2007, %v1504
  %2036 = vst.msk [vmem:[%s2 + $0xe0] sm:$0xff] %vm2007, %v1509
  %2037 = vst.msk [vmem:[%s2 + $0xe8] sm:$0xff] %vm2007, %v1514
  %2038 = vst.msk [vmem:[%s2 + $0xf0] sm:$0xff] %vm2007, %v1519
  %2039 = vst.msk [vmem:[%s2 + $0xf8] sm:$0xff] %vm2007, %v1524
  %2040 = vst.msk [vmem:[%s2 + $0x100] sm:$0xff] %vm2007, %v1529
  %2041 = vst.msk [vmem:[%s2 + $0x108] sm:$0xff] %vm2007, %v1534
  %2042 = vst.msk [vmem:[%s2 + $0x110] sm:$0xff] %vm2007, %v1539
  %2043 = vst.msk [vmem:[%s2 + $0x118] sm:$0xff] %vm2007, %v1544
  %2044 = vst.msk [vmem:[%s2 + $0x120] sm:$0xff] %vm2007, %v1549
  %2045 = vst.msk [vmem:[%s2 + $0x128] sm:$0xff] %vm2007, %v1554
  %2046 = vst.msk [vmem:[%s2 + $0x130] sm:$0xff] %vm2007, %v1559
  %2047 = vst.msk [vmem:[%s2 + $0x138] sm:$0xff] %vm2007, %v1564
  %2048 = vst.msk [vmem:[%s2 + $0x140] sm:$0xff] %vm2007, %v1569
  %2049 = vst.msk [vmem:[%s2 + $0x148] sm:$0xff] %vm2007, %v1574
  %2050 = vst.msk [vmem:[%s2 + $0x150] sm:$0xff] %vm2007, %v1579
  %2051 = vst.msk [vmem:[%s2 + $0x158] sm:$0xff] %vm2007, %v1584
  %2052 = vst.msk [vmem:[%s2 + $0x160] sm:$0xff] %vm2007, %v1589
  %2053 = vst.msk [vmem:[%s2 + $0x168] sm:$0xff] %vm2007, %v1594
  %2054 = vst.msk [vmem:[%s2 + $0x170] sm:$0xff] %vm2007, %v1599
  %2055 = vst.msk [vmem:[%s2 + $0x178] sm:$0xff] %vm2007, %v1604
  %2056 = vst.msk [vmem:[%s2 + $0x180] sm:$0xff] %vm2007, %v1609
  %2057 = vst.msk [vmem:[%s2 + $0x188] sm:$0xff] %vm2007, %v1614
  %2058 = vst.msk [vmem:[%s2 + $0x190] sm:$0xff] %vm2007, %v1619
  %2059 = vst.msk [vmem:[%s2 + $0x198] sm:$0xff] %vm2007, %v1624
  %2060 = vst.msk [vmem:[%s2 + $0x1a0] sm:$0xff] %vm2007, %v1629
  %2061 = vst.msk [vmem:[%s2 + $0x1a8] sm:$0xff] %vm2007, %v1634
  %2062 = vst.msk [vmem:[%s2 + $0x1b0] sm:$0xff] %vm2007, %v1639
  %2063 = vst.msk [vmem:[%s2 + $0x1b8] sm:$0xff] %vm2007, %v1644
  %2064 = vst.msk [vmem:[%s2 + $0x1c0] sm:$0xff] %vm2007, %v1649
  %2065 = vst.msk [vmem:[%s2 + $0x1c8] sm:$0xff] %vm2007, %v1654
  %2066 = vst.msk [vmem:[%s2 + $0x1d0] sm:$0xff] %vm2007, %v1659
  %2067 = vst.msk [vmem:[%s2 + $0x1d8] sm:$0xff] %vm2007, %v1664
  %2068 = vst.msk [vmem:[%s2 + $0x1e0] sm:$0xff] %vm2007, %v1669
  %2069 = vst.msk [vmem:[%s2 + $0x1e8] sm:$0xff] %vm2007, %v1674
  %2070 = vst.msk [vmem:[%s2 + $0x1f0] sm:$0xff] %vm2007, %v1679
  %2071 = vst.msk [vmem:[%s2 + $0x1f8] sm:$0xff] %vm2007, %v1684
  %2072 = vst.msk [vmem:[%s2 + $0x200] sm:$0xff] %vm2007, %v1689
  %2073 = vst.msk [vmem:[%s2 + $0x208] sm:$0xff] %vm2007, %v1694
  %2074 = vst.msk [vmem:[%s2 + $0x210] sm:$0xff] %vm2007, %v1699
  %2075 = vst.msk [vmem:[%s2 + $0x218] sm:$0xff] %vm2007, %v1704
  %2076 = vst.msk [vmem:[%s2 + $0x220] sm:$0xff] %vm2007, %v1709
  %2077 = vst.msk [vmem:[%s2 + $0x228] sm:$0xff] %vm2007, %v1714
  %2078 = vst.msk [vmem:[%s2 + $0x230] sm:$0xff] %vm2007, %v1719
  %2079 = vst.msk [vmem:[%s2 + $0x238] sm:$0xff] %vm2007, %v1724
  %2080 = vst.msk [vmem:[%s2 + $0x240] sm:$0xff] %vm2007, %v1729
  %2081 = vst.msk [vmem:[%s2 + $0x248] sm:$0xff] %vm2007, %v1734
  %2082 = vst.msk [vmem:[%s2 + $0x250] sm:$0xff] %vm2007, %v1739
  %2083 = vst.msk [vmem:[%s2 + $0x258] sm:$0xff] %vm2007, %v1744
  %2084 = vst.msk [vmem:[%s2 + $0x260] sm:$0xff] %vm2007, %v1749
  %2085 = vst.msk [vmem:[%s2 + $0x268] sm:$0xff] %vm2007, %v1754
  %2086 = vst.msk [vmem:[%s2 + $0x270] sm:$0xff] %vm2007, %v1759
  %2087 = vst.msk [vmem:[%s2 + $0x278] sm:$0xff] %vm2007, %v1764
  %2088 = vst.msk [vmem:[%s2 + $0x280] sm:$0xff] %vm2007, %v1769
  %2089 = vst.msk [vmem:[%s2 + $0x288] sm:$0xff] %vm2007, %v1774
  %2090 = vst.msk [vmem:[%s2 + $0x290] sm:$0xff] %vm2007, %v1779
  %2091 = vst.msk [vmem:[%s2 + $0x298] sm:$0xff] %vm2007, %v1784
  %2092 = vst.msk [vmem:[%s2 + $0x2a0] sm:$0xff] %vm2007, %v1789
  %2093 = vst.msk [vmem:[%s2 + $0x2a8] sm:$0xff] %vm2007, %v1794
  %2094 = vst.msk [vmem:[%s2 + $0x2b0] sm:$0xff] %vm2007, %v1799
  %2095 = vst.msk [vmem:[%s2 + $0x2b8] sm:$0xff] %vm2007, %v1804
  %2096 = vst.msk [vmem:[%s2 + $0x2c0] sm:$0xff] %vm2007, %v1809
  %2097 = vst.msk [vmem:[%s2 + $0x2c8] sm:$0xff] %vm2007, %v1814
  %2098 = vst.msk [vmem:[%s2 + $0x2d0] sm:$0xff] %vm2007, %v1819
  %2099 = vst.msk [vmem:[%s2 + $0x2d8] sm:$0xff] %vm2007, %v1824
  %2100 = vst.msk [vmem:[%s2 + $0x2e0] sm:$0xff] %vm2007, %v1829
  %2101 = vst.msk [vmem:[%s2 + $0x2e8] sm:$0xff] %vm2007, %v1834
  %2102 = vst.msk [vmem:[%s2 + $0x2f0] sm:$0xff] %vm2007, %v1839
  %2103 = vst.msk [vmem:[%s2 + $0x2f8] sm:$0xff] %vm2007, %v1844
  %2104 = vst.msk [vmem:[%s2 + $0x300] sm:$0xff] %vm2007, %v1849
  %2105 = vst.msk [vmem:[%s2 + $0x308] sm:$0xff] %vm2007, %v1854
  %2106 = vst.msk [vmem:[%s2 + $0x310] sm:$0xff] %vm2007, %v1859
  %2107 = vst.msk [vmem:[%s2 + $0x318] sm:$0xff] %vm2007, %v1864
  %2108 = vst.msk [vmem:[%s2 + $0x320] sm:$0xff] %vm2007, %v1869
  %2109 = vst.msk [vmem:[%s2 + $0x328] sm:$0xff] %vm2007, %v1874
  %2110 = vst.msk [vmem:[%s2 + $0x330] sm:$0xff] %vm2007, %v1879
  %2111 = vst.msk [vmem:[%s2 + $0x338] sm:$0xff] %vm2007, %v1884
  %2112 = vst.msk [vmem:[%s2 + $0x340] sm:$0xff] %vm2007, %v1889
  %2113 = vst.msk [vmem:[%s2 + $0x348] sm:$0xff] %vm2007, %v1894
  %2114 = vst.msk [vmem:[%s2 + $0x350] sm:$0xff] %vm2007, %v1899
  %2115 = vst.msk [vmem:[%s2 + $0x358] sm:$0xff] %vm2007, %v1904
  %2116 = vst.msk [vmem:[%s2 + $0x360] sm:$0xff] %vm2007, %v1909
  %2117 = vst.msk [vmem:[%s2 + $0x368] sm:$0xff] %vm2007, %v1914
  %2118 = vst.msk [vmem:[%s2 + $0x370] sm:$0xff] %vm2007, %v1919
  %2119 = vst.msk [vmem:[%s2 + $0x378] sm:$0xff] %vm2007, %v1924
  %2120 = vst.msk [vmem:[%s2 + $0x380] sm:$0xff] %vm2007, %v1929
  %2121 = vst.msk [vmem:[%s2 + $0x388] sm:$0xff] %vm2007, %v1934
  %2122 = vst.msk [vmem:[%s2 + $0x390] sm:$0xff] %vm2007, %v1939
  %2123 = vst.msk [vmem:[%s2 + $0x398] sm:$0xff] %vm2007, %v1944
  %2124 = vst.msk [vmem:[%s2 + $0x3a0] sm:$0xff] %vm2007, %v1949
  %2125 = vst.msk [vmem:[%s2 + $0x3a8] sm:$0xff] %vm2007, %v1954
  %2126 = vst.msk [vmem:[%s2 + $0x3b0] sm:$0xff] %vm2007, %v1959
  %2127 = vst.msk [vmem:[%s2 + $0x3b8] sm:$0xff] %vm2007, %v1964
  %2128 = vst.msk [vmem:[%s2 + $0x3c0] sm:$0xff] %vm2007, %v1969
  %2129 = vst.msk [vmem:[%s2 + $0x3c8] sm:$0xff] %vm2007, %v1974
  %2130 = vst.msk [vmem:[%s2 + $0x3d0] sm:$0xff] %vm2007, %v1979
  %2131 = vst.msk [vmem:[%s2 + $0x3d8] sm:$0xff] %vm2007, %v1984
  %2132 = vst.msk [vmem:[%s2 + $0x3e0] sm:$0xff] %vm2007, %v1989
  %2133 = vst.msk [vmem:[%s2 + $0x3e8] sm:$0xff] %vm2007, %v1994
  %2134 = vst.msk [vmem:[%s2 + $0x3f0] sm:$0xff] %vm2007, %v1999
  %2135 = vst.msk [vmem:[%s2 + $0x3f8] sm:$0xff] %vm2007, %v2004
  // Predicated region
  $region10: #{tpu_custom_call.1} parent=0 // pred_check
    _
  $region11: #{tpu_custom_call.1} parent=0 // pred_check_branch
    %2137 = sbr.rel (0) target = $region13
  $region12: #{tpu_custom_call.1} parent=0 // pred_region
    _
  $region13: #{tpu_custom_call.1} parent=0 // pred_fallthru
    _
  // Predicated region
  $region14: #{tpu_custom_call.1} parent=0 // pred_check
    _
  $region15: #{tpu_custom_call.1} parent=0 // pred_check_branch
    %2139 = sbr.rel (0) target = $region17
  $region16: #{tpu_custom_call.1} parent=0 // pred_region
    _
  $region17: #{tpu_custom_call.1} parent=0 // pred_fallthru
    _

</llo_original>
